<compile_context>
chip_gen: v7x
topology: tpu7x:2x2x1
jax: 0.10.0
libtpu: 0.0.40
codegen_flags: <defaults>
</compile_context>

<pallas_src>
import math

import jax
import jax.numpy as jnp
from jax import lax
from jax.experimental import pallas as pl
from jax.experimental.pallas import tpu as pltpu

# ---- model hyper-parameters (small, consistent with the module) ----
B = 2          # batch
S = 8          # sequence length
D_MODEL = 32   # d_model
NUM_HEADS = 4
D_K = D_MODEL // NUM_HEADS
D_FF = 64
LN_EPS = 1e-5
NEG_INF = -1e9


def encoder_layer_kernel(
    x_ref,        # (N, D)        N = B*S tokens, flattened in the wrapper
    bias_ref,     # (N, N)        additive attention bias (block-diag + key mask)
    w_qkv_ref,    # (D, 3D)       fused QKV weight, Q columns pre-scaled by 1/sqrt(dk)
    wo_ref,       # (D, D)        output projection weight (head-major columns/rows)
    w1_ref,       # (D, Dff)
    w2_ref,       # (Dff, D)
    bwide_ref,    # (2, 3D)       row 0 = fused QKV bias, row 1[:Dff] = FF bias b1
    pvec_ref,     # (6, D)        rows: bo, gamma1, beta1, b2, gamma2, beta2
    o_ref,        # (N, D)
):
    """Single invocation: whole (B*S, D) token block resident in VMEM."""
    f32 = jnp.float32
    x = x_ref[...].astype(f32)                          # (N, D)
    n_tok = x.shape[0]

    # ---- fused QKV projection: one lane-dense matmul ----
    qkv = jnp.dot(x, w_qkv_ref[...], preferred_element_type=f32)      # (N, 3D)
    qkv = qkv + bwide_ref[0:1, :]                                      # broadcast add
    # per-head view: (N, 3H, Dk) -> (3H, N, Dk); small XLU relayout, no extra matmuls
    qkv_h = qkv.reshape(n_tok, 3 * NUM_HEADS, D_K).transpose(1, 0, 2)
    q = qkv_h[:NUM_HEADS]                    # (H, N, Dk) -- already scaled by 1/sqrt(dk)
    k = qkv_h[NUM_HEADS:2 * NUM_HEADS]       # (H, N, Dk)
    v = qkv_h[2 * NUM_HEADS:]                # (H, N, Dk)

    # ---- all-heads attention over all tokens; bias keeps batches separate ----
    scores = jnp.einsum("hqd,hkd->hqk", q, k,
                        preferred_element_type=f32) + bias_ref[...][None]   # (H,N,N)
    m = jnp.max(scores, axis=-1, keepdims=True)
    e = jnp.exp(scores - m)
    denom = jnp.sum(e, axis=-1, keepdims=True)
    r = pl.reciprocal(denom, approx=True)           # EUP slot
    r = r * (2.0 - denom * r)                       # one Newton step -> ~f32 precision
    probs = e * r                                                       # (H, N, N)
    ctx = jnp.einsum("hqk,hkd->hqd", probs, v,
                     preferred_element_type=f32)                        # (H, N, Dk)

    # ---- output projection: head reduction folded into a single MXU pass ----
    ctx2 = ctx.transpose(1, 0, 2).reshape(n_tok, D_MODEL)               # (N, D)
    attn = jnp.dot(ctx2, wo_ref[...],
                   preferred_element_type=f32) + pvec_ref[0:1, :]       # (N, D)

    # ---- residual + LayerNorm 1 (dropout = identity in eval) ----
    h1 = x + attn
    mu1 = jnp.mean(h1, axis=-1, keepdims=True)
    var1 = jnp.mean((h1 - mu1) ** 2, axis=-1, keepdims=True)
    h1n = (h1 - mu1) * lax.rsqrt(var1 + LN_EPS) * pvec_ref[1:2, :] + pvec_ref[2:3, :]

    # ---- position-wise feed-forward ----
    ff = jnp.dot(h1n, w1_ref[...], preferred_element_type=f32) + bwide_ref[1:2, :D_FF]
    ff = jnp.maximum(ff, 0.0)
    ff = jnp.dot(ff, w2_ref[...], preferred_element_type=f32) + pvec_ref[3:4, :]

    # ---- residual + LayerNorm 2 ----
    h2 = h1n + ff
    mu2 = jnp.mean(h2, axis=-1, keepdims=True)
    var2 = jnp.mean((h2 - mu2) ** 2, axis=-1, keepdims=True)
    out = (h2 - mu2) * lax.rsqrt(var2 + LN_EPS) * pvec_ref[4:5, :] + pvec_ref[5:6, :]

    o_ref[...] = out.astype(o_ref.dtype)


def _full_spec(shape):
    """Whole-array block, same block for the single grid step."""
    nd = len(shape)
    return pl.BlockSpec(shape, lambda *_: (0,) * nd)


@jax.jit
def encoder_layer(x, mask, params):
    (wq, bq, wk, bk, wv, bv, wo, bo,
     g1, be1, w1, b1, w2, b2, g2, be2) = params

    batch, seq, d = x.shape
    n = batch * seq

    # ---------- host/XLA-side operand packing (zero kernel cost) ----------
    inv_sqrt_dk = jnp.float32(1.0 / math.sqrt(D_K))

    # Fused, lane-dense QKV weight/bias; 1/sqrt(d_k) folded into the Q block.
    w_qkv = jnp.concatenate([wq * inv_sqrt_dk, wk, wv], axis=1)          # (D, 3D)
    b_qkv = jnp.concatenate([bq * inv_sqrt_dk, bk, bv], axis=1)          # (1, 3D)

    # Stack the FF-1 bias next to the QKV bias (padded to 3D lanes).
    b1_pad = jnp.pad(b1, ((0, 0), (0, 3 * d - D_FF)))                    # (1, 3D)
    b_wide = jnp.concatenate([b_qkv, b1_pad], axis=0)                    # (2, 3D)

    # Stack all the (1, D) vectors into one operand.
    p_vec = jnp.concatenate([bo, g1, be1, b2, g2, be2], axis=0)          # (6, D)

    # Additive attention bias over the flattened token axis:
    #  - -1e9 across different batches (block-diagonal attention)
    #  - -1e9 where the user mask is 0 within a batch, 0 otherwise.
    tok = jnp.arange(n)
    same_batch = (tok[:, None] // seq) == (tok[None, :] // seq)          # (N, N)
    inner = jnp.where(mask == 0.0, jnp.float32(NEG_INF), jnp.float32(0.0))  # (B,S,S)
    inner_full = inner[tok[:, None] // seq, tok[:, None] % seq, tok[None, :] % seq]
    bias = jnp.where(same_batch, inner_full, jnp.float32(NEG_INF))       # (N, N)

    x_flat = x.reshape(n, d)

    operands = (x_flat, bias, w_qkv, wo, w1, w2, b_wide, p_vec)          # 8 operands
    in_specs = [_full_spec(op.shape) for op in operands]

    out_flat = pl.pallas_call(
        encoder_layer_kernel,
        out_shape=jax.ShapeDtypeStruct((n, d), x.dtype),
        grid_spec=pltpu.PrefetchScalarGridSpec(
            num_scalar_prefetch=0,
            grid=(1,),                      # single step: no serial batch loop
            in_specs=in_specs,
            out_specs=pl.BlockSpec((n, d), lambda *_: (0, 0)),
        ),
        compiler_params=pltpu.CompilerParams(
            dimension_semantics=("arbitrary",)),
    )(*operands)

    return out_flat.reshape(batch, seq, d)


def reference_encoder_layer(x, mask, params):
    """Pure-JAX reference mirroring the PyTorch forward (eval mode)."""
    (wq, bq, wk, bk, wv, bv, wo, bo,
     g1, be1, w1, b1, w2, b2, g2, be2) = params
    b, s, d = x.shape

    def proj(x_, w, bias):
        return x_ @ w + bias  # bias is (1, n) -> broadcasts

    q = proj(x, wq, bq).reshape(b, s, NUM_HEADS, D_K).transpose(0, 2, 1, 3)
    k = proj(x, wk, bk).reshape(b, s, NUM_HEADS, D_K).transpose(0, 2, 1, 3)
    v = proj(x, wv, bv).reshape(b, s, NUM_HEADS, D_K).transpose(0, 2, 1, 3)

    scores = jnp.einsum("bhqd,bhkd->bhqk", q, k) / math.sqrt(D_K)
    scores = jnp.where(mask[:, None, :, :] == 0.0, NEG_INF, scores)
    probs = jax.nn.softmax(scores, axis=-1)
    attn = jnp.einsum("bhqk,bhkd->bhqd", probs, v)
    attn = attn.transpose(0, 2, 1, 3).reshape(b, s, d)
    attn = attn @ wo + bo

    def ln(h_, g, beta):
        mu = jnp.mean(h_, axis=-1, keepdims=True)
        var = jnp.mean((h_ - mu) ** 2, axis=-1, keepdims=True)
        return (h_ - mu) * lax.rsqrt(var + LN_EPS) * g + beta

    h1 = ln(x + attn, g1, be1)
    ff = jnp.maximum(h1 @ w1 + b1, 0.0) @ w2 + b2
    return ln(h1 + ff, g2, be2)


def init_params(key):
    """Deterministic synthetic parameters (shapes per the module __init__)."""
    ks = jax.random.split(key, 8)
    scale = 0.1

    def lin(k, fan_in, fan_out):
        kw, kb = jax.random.split(k)
        w = jax.random.normal(kw, (fan_in, fan_out), jnp.float32) * scale
        b = jax.random.normal(kb, (1, fan_out), jnp.float32) * scale
        return w, b

    wq, bq = lin(ks[0], D_MODEL, D_MODEL)
    wk, bk = lin(ks[1], D_MODEL, D_MODEL)
    wv, bv = lin(ks[2], D_MODEL, D_MODEL)
    wo, bo = lin(ks[3], D_MODEL, D_MODEL)
    w1, b1 = lin(ks[4], D_MODEL, D_FF)
    w2, b2 = lin(ks[5], D_FF, D_MODEL)
    # LayerNorm params (PyTorch default init: gamma=1, beta=0)
    g1 = jnp.ones((1, D_MODEL), jnp.float32)
    be1 = jnp.zeros((1, D_MODEL), jnp.float32)
    g2 = jnp.ones((1, D_MODEL), jnp.float32)
    be2 = jnp.zeros((1, D_MODEL), jnp.float32)
    return (wq, bq, wk, bk, wv, bv, wo, bo,
            g1, be1, w1, b1, w2, b2, g2, be2)


if __name__ == "__main__":
    key = jax.random.PRNGKey(0)
    kx, kp = jax.random.split(key)

    x = jax.random.normal(kx, (B, S, D_MODEL), jnp.float32)

    # Key-padding style mask: batch 0 attends everywhere, batch 1 masks
    # the last two key positions. Shape (B, S, S), 1.0 = keep, 0.0 = mask.
    mask = jnp.ones((B, S, S), jnp.float32)
    mask = mask.at[1, :, S - 2:].set(0.0)

    params = init_params(kp)

    out = encoder_layer(x, mask, params)
    out = jax.block_until_ready(out)

    ref = reference_encoder_layer(x, mask, params)
    assert out.shape == (B, S, D_MODEL)
    assert jnp.allclose(out, ref, atol=1e-4, rtol=1e-4), "mismatch vs reference"

    print("KERNEL_OK")
</pallas_src>

<mosaic_0001>
module attributes {stable_mosaic.version = 11 : i64} {
  func.func @encoder_layer_kernel(%arg0: i32, %arg1: memref<16x32xf32, #tpu.memory_space<vmem>>, %arg2: memref<16x16xf32, #tpu.memory_space<vmem>>, %arg3: memref<32x96xf32, #tpu.memory_space<vmem>>, %arg4: memref<32x32xf32, #tpu.memory_space<vmem>>, %arg5: memref<32x64xf32, #tpu.memory_space<vmem>>, %arg6: memref<64x32xf32, #tpu.memory_space<vmem>>, %arg7: memref<2x96xf32, #tpu.memory_space<vmem>>, %arg8: memref<6x32xf32, #tpu.memory_space<vmem>>, %arg9: memref<16x32xf32, #tpu.memory_space<vmem>>) attributes {dimension_semantics = [#tpu.dimension_semantics<arbitrary>], iteration_bounds = array<i64: 1>, scalar_prefetch = 0 : i64, scratch_operands = 0 : i64, tpu.core_type = #tpu.core_type<tc>, window_params = [{pipeline_mode = #tpu.pipeline_mode<synchronous>, transform_indices = @transform_0, window_bounds = array<i64: 16, 32>}, {pipeline_mode = #tpu.pipeline_mode<synchronous>, transform_indices = @transform_1, window_bounds = array<i64: 16, 16>}, {pipeline_mode = #tpu.pipeline_mode<synchronous>, transform_indices = @transform_2, window_bounds = array<i64: 32, 96>}, {pipeline_mode = #tpu.pipeline_mode<synchronous>, transform_indices = @transform_3, window_bounds = array<i64: 32, 32>}, {pipeline_mode = #tpu.pipeline_mode<synchronous>, transform_indices = @transform_4, window_bounds = array<i64: 32, 64>}, {pipeline_mode = #tpu.pipeline_mode<synchronous>, transform_indices = @transform_5, window_bounds = array<i64: 64, 32>}, {pipeline_mode = #tpu.pipeline_mode<synchronous>, transform_indices = @transform_6, window_bounds = array<i64: 2, 96>}, {pipeline_mode = #tpu.pipeline_mode<synchronous>, transform_indices = @transform_7, window_bounds = array<i64: 6, 32>}, {pipeline_mode = #tpu.pipeline_mode<synchronous>, transform_indices = @transform_8, window_bounds = array<i64: 16, 32>}]} {
    %c0 = arith.constant 0 : index
    %c0_0 = arith.constant 0 : index
    %0 = vector.load %arg1[%c0, %c0_0] : memref<16x32xf32, #tpu.memory_space<vmem>>, vector<16x32xf32>
    %c0_1 = arith.constant 0 : index
    %c0_2 = arith.constant 0 : index
    %1 = vector.load %arg3[%c0_1, %c0_2] : memref<32x96xf32, #tpu.memory_space<vmem>>, vector<32x96xf32>
    %cst = arith.constant dense<0.000000e+00> : vector<16x96xf32>
    %2 = tpu.matmul %0, %1, %cst {dimension_numbers = #tpu.dot_dimension_numbers<[1], [0], [0], [1], [0, 0, 1, 1], [], []>} : vector<16x32xf32>, vector<32x96xf32>, vector<16x96xf32> -> vector<16x96xf32>
    %c0_3 = arith.constant 0 : index
    %c0_4 = arith.constant 0 : index
    %3 = vector.load %arg7[%c0_3, %c0_4] : memref<2x96xf32, #tpu.memory_space<vmem>>, vector<1x96xf32>
    %4 = vector.broadcast %3 : vector<1x96xf32> to vector<16x96xf32>
    %5 = arith.addf %2, %4 : vector<16x96xf32>
    %6 = vector.shape_cast %5 : vector<16x96xf32> to vector<16x12x8xf32>
    %7 = tpu.transpose %6, [1, 0, 2] : vector<16x12x8xf32> -> vector<12x16x8xf32>
    %8 = vector.extract_strided_slice %7 {offsets = [0, 0, 0], sizes = [4, 16, 8], strides = [1, 1, 1]} : vector<12x16x8xf32> to vector<4x16x8xf32>
    %9 = vector.extract_strided_slice %7 {offsets = [4, 0, 0], sizes = [4, 16, 8], strides = [1, 1, 1]} : vector<12x16x8xf32> to vector<4x16x8xf32>
    %10 = vector.extract_strided_slice %7 {offsets = [8, 0, 0], sizes = [4, 16, 8], strides = [1, 1, 1]} : vector<12x16x8xf32> to vector<4x16x8xf32>
    "tpu.trace_start"() <{level = 10 : i32, message = "hqd,hkd->hqk"}> : () -> ()
    %cst_5 = arith.constant dense<0.000000e+00> : vector<4x16x16xf32>
    %11 = tpu.matmul %8, %9, %cst_5 {dimension_numbers = #tpu.dot_dimension_numbers<[2], [2], [1], [1], [0, 0, 0, 1, 1, 1], [0], [0]>} : vector<4x16x8xf32>, vector<4x16x8xf32>, vector<4x16x16xf32> -> vector<4x16x16xf32>
    "tpu.trace_stop"() : () -> ()
    %c0_6 = arith.constant 0 : index
    %c0_7 = arith.constant 0 : index
    %12 = vector.load %arg2[%c0_6, %c0_7] : memref<16x16xf32, #tpu.memory_space<vmem>>, vector<16x16xf32>
    %13 = vector.shape_cast %12 : vector<16x16xf32> to vector<1x16x16xf32>
    %14 = vector.broadcast %13 : vector<1x16x16xf32> to vector<4x16x16xf32>
    %15 = arith.addf %11, %14 : vector<4x16x16xf32>
    %cst_8 = arith.constant dense<0xFF800000> : vector<4x16xf32>
    %16 = vector.multi_reduction <maximumf>, %15, %cst_8 [2] : vector<4x16x16xf32> to vector<4x16xf32>
    %17 = vector.shape_cast %16 : vector<4x16xf32> to vector<4x16x1xf32>
    %18 = vector.broadcast %17 : vector<4x16x1xf32> to vector<4x16x16xf32>
    %19 = arith.subf %15, %18 : vector<4x16x16xf32>
    %20 = math.exp %19 : vector<4x16x16xf32>
    %cst_9 = arith.constant dense<0.000000e+00> : vector<4x16xf32>
    %21 = vector.multi_reduction <add>, %20, %cst_9 [2] : vector<4x16x16xf32> to vector<4x16xf32>
    %22 = vector.shape_cast %21 : vector<4x16xf32> to vector<4x16x1xf32>
    %23 = tpu.reciprocal %22 {approx = true} : vector<4x16x1xf32> -> vector<4x16x1xf32>
    %24 = arith.mulf %22, %23 : vector<4x16x1xf32>
    %cst_10 = arith.constant 2.000000e+00 : f32
    %25 = vector.broadcast %cst_10 : f32 to vector<4x16x1xf32>
    %26 = arith.subf %25, %24 : vector<4x16x1xf32>
    %27 = arith.mulf %23, %26 : vector<4x16x1xf32>
    %28 = vector.broadcast %27 : vector<4x16x1xf32> to vector<4x16x16xf32>
    %29 = arith.mulf %20, %28 : vector<4x16x16xf32>
    "tpu.trace_start"() <{level = 10 : i32, message = "hqk,hkd->hqd"}> : () -> ()
    %cst_11 = arith.constant dense<0.000000e+00> : vector<4x16x8xf32>
    %30 = tpu.matmul %29, %10, %cst_11 {dimension_numbers = #tpu.dot_dimension_numbers<[2], [1], [1], [2], [0, 0, 0, 1, 1, 2], [0], [0]>} : vector<4x16x16xf32>, vector<4x16x8xf32>, vector<4x16x8xf32> -> vector<4x16x8xf32>
    "tpu.trace_stop"() : () -> ()
    %31 = tpu.transpose %30, [1, 0, 2] : vector<4x16x8xf32> -> vector<16x4x8xf32>
    %32 = vector.shape_cast %31 : vector<16x4x8xf32> to vector<16x32xf32>
    %c0_12 = arith.constant 0 : index
    %c0_13 = arith.constant 0 : index
    %33 = vector.load %arg4[%c0_12, %c0_13] : memref<32x32xf32, #tpu.memory_space<vmem>>, vector<32x32xf32>
    %cst_14 = arith.constant dense<0.000000e+00> : vector<16x32xf32>
    %34 = tpu.matmul %32, %33, %cst_14 {dimension_numbers = #tpu.dot_dimension_numbers<[1], [0], [0], [1], [0, 0, 1, 1], [], []>} : vector<16x32xf32>, vector<32x32xf32>, vector<16x32xf32> -> vector<16x32xf32>
    %c0_15 = arith.constant 0 : index
    %c0_16 = arith.constant 0 : index
    %35 = vector.load %arg8[%c0_15, %c0_16] : memref<6x32xf32, #tpu.memory_space<vmem>>, vector<1x32xf32>
    %36 = vector.broadcast %35 : vector<1x32xf32> to vector<16x32xf32>
    %37 = arith.addf %34, %36 : vector<16x32xf32>
    %38 = arith.addf %0, %37 : vector<16x32xf32>
    %cst_17 = arith.constant dense<0.000000e+00> : vector<16xf32>
    %39 = vector.multi_reduction <add>, %38, %cst_17 [1] : vector<16x32xf32> to vector<16xf32>
    %40 = vector.shape_cast %39 : vector<16xf32> to vector<16x1xf32>
    %cst_18 = arith.constant 3.200000e+01 : f32
    %41 = vector.broadcast %cst_18 : f32 to vector<16x1xf32>
    %42 = arith.divf %40, %41 : vector<16x1xf32>
    %43 = vector.broadcast %42 : vector<16x1xf32> to vector<16x32xf32>
    %44 = arith.subf %38, %43 : vector<16x32xf32>
    %45 = arith.mulf %44, %44 : vector<16x32xf32>
    %cst_19 = arith.constant dense<0.000000e+00> : vector<16xf32>
    %46 = vector.multi_reduction <add>, %45, %cst_19 [1] : vector<16x32xf32> to vector<16xf32>
    %47 = vector.shape_cast %46 : vector<16xf32> to vector<16x1xf32>
    %cst_20 = arith.constant 3.200000e+01 : f32
    %48 = vector.broadcast %cst_20 : f32 to vector<16x1xf32>
    %49 = arith.divf %47, %48 : vector<16x1xf32>
    %50 = vector.broadcast %42 : vector<16x1xf32> to vector<16x32xf32>
    %51 = arith.subf %38, %50 : vector<16x32xf32>
    %cst_21 = arith.constant 9.99999974E-6 : f32
    %52 = vector.broadcast %cst_21 : f32 to vector<16x1xf32>
    %53 = arith.addf %49, %52 : vector<16x1xf32>
    %54 = math.rsqrt %53 : vector<16x1xf32>
    %55 = vector.broadcast %54 : vector<16x1xf32> to vector<16x32xf32>
    %56 = arith.mulf %51, %55 : vector<16x32xf32>
    %c1 = arith.constant 1 : index
    %c0_22 = arith.constant 0 : index
    %57 = vector.load %arg8[%c1, %c0_22] : memref<6x32xf32, #tpu.memory_space<vmem>>, vector<1x32xf32>
    %58 = vector.broadcast %57 : vector<1x32xf32> to vector<16x32xf32>
    %59 = arith.mulf %56, %58 : vector<16x32xf32>
    %c2 = arith.constant 2 : index
    %c0_23 = arith.constant 0 : index
    %60 = vector.load %arg8[%c2, %c0_23] : memref<6x32xf32, #tpu.memory_space<vmem>>, vector<1x32xf32>
    %61 = vector.broadcast %60 : vector<1x32xf32> to vector<16x32xf32>
    %62 = arith.addf %59, %61 : vector<16x32xf32>
    %c0_24 = arith.constant 0 : index
    %c0_25 = arith.constant 0 : index
    %63 = vector.load %arg5[%c0_24, %c0_25] : memref<32x64xf32, #tpu.memory_space<vmem>>, vector<32x64xf32>
    %cst_26 = arith.constant dense<0.000000e+00> : vector<16x64xf32>
    %64 = tpu.matmul %62, %63, %cst_26 {dimension_numbers = #tpu.dot_dimension_numbers<[1], [0], [0], [1], [0, 0, 1, 1], [], []>} : vector<16x32xf32>, vector<32x64xf32>, vector<16x64xf32> -> vector<16x64xf32>
    %c1_27 = arith.constant 1 : index
    %c0_28 = arith.constant 0 : index
    %65 = vector.load %arg7[%c1_27, %c0_28] : memref<2x96xf32, #tpu.memory_space<vmem>>, vector<1x64xf32>
    %66 = vector.broadcast %65 : vector<1x64xf32> to vector<16x64xf32>
    %67 = arith.addf %64, %66 : vector<16x64xf32>
    %cst_29 = arith.constant 0.000000e+00 : f32
    %68 = vector.broadcast %cst_29 : f32 to vector<16x64xf32>
    %69 = arith.maximumf %67, %68 : vector<16x64xf32>
    %c0_30 = arith.constant 0 : index
    %c0_31 = arith.constant 0 : index
    %70 = vector.load %arg6[%c0_30, %c0_31] : memref<64x32xf32, #tpu.memory_space<vmem>>, vector<64x32xf32>
    %cst_32 = arith.constant dense<0.000000e+00> : vector<16x32xf32>
    %71 = tpu.matmul %69, %70, %cst_32 {dimension_numbers = #tpu.dot_dimension_numbers<[1], [0], [0], [1], [0, 0, 1, 1], [], []>} : vector<16x64xf32>, vector<64x32xf32>, vector<16x32xf32> -> vector<16x32xf32>
    %c3 = arith.constant 3 : index
    %c0_33 = arith.constant 0 : index
    %72 = vector.load %arg8[%c3, %c0_33] : memref<6x32xf32, #tpu.memory_space<vmem>>, vector<1x32xf32>
    %73 = vector.broadcast %72 : vector<1x32xf32> to vector<16x32xf32>
    %74 = arith.addf %71, %73 : vector<16x32xf32>
    %75 = arith.addf %62, %74 : vector<16x32xf32>
    %cst_34 = arith.constant dense<0.000000e+00> : vector<16xf32>
    %76 = vector.multi_reduction <add>, %75, %cst_34 [1] : vector<16x32xf32> to vector<16xf32>
    %77 = vector.shape_cast %76 : vector<16xf32> to vector<16x1xf32>
    %cst_35 = arith.constant 3.200000e+01 : f32
    %78 = vector.broadcast %cst_35 : f32 to vector<16x1xf32>
    %79 = arith.divf %77, %78 : vector<16x1xf32>
    %80 = vector.broadcast %79 : vector<16x1xf32> to vector<16x32xf32>
    %81 = arith.subf %75, %80 : vector<16x32xf32>
    %82 = arith.mulf %81, %81 : vector<16x32xf32>
    %cst_36 = arith.constant dense<0.000000e+00> : vector<16xf32>
    %83 = vector.multi_reduction <add>, %82, %cst_36 [1] : vector<16x32xf32> to vector<16xf32>
    %84 = vector.shape_cast %83 : vector<16xf32> to vector<16x1xf32>
    %cst_37 = arith.constant 3.200000e+01 : f32
    %85 = vector.broadcast %cst_37 : f32 to vector<16x1xf32>
    %86 = arith.divf %84, %85 : vector<16x1xf32>
    %87 = vector.broadcast %79 : vector<16x1xf32> to vector<16x32xf32>
    %88 = arith.subf %75, %87 : vector<16x32xf32>
    %cst_38 = arith.constant 9.99999974E-6 : f32
    %89 = vector.broadcast %cst_38 : f32 to vector<16x1xf32>
    %90 = arith.addf %86, %89 : vector<16x1xf32>
    %91 = math.rsqrt %90 : vector<16x1xf32>
    %92 = vector.broadcast %91 : vector<16x1xf32> to vector<16x32xf32>
    %93 = arith.mulf %88, %92 : vector<16x32xf32>
    %c4 = arith.constant 4 : index
    %c0_39 = arith.constant 0 : index
    %94 = vector.load %arg8[%c4, %c0_39] : memref<6x32xf32, #tpu.memory_space<vmem>>, vector<1x32xf32>
    %95 = vector.broadcast %94 : vector<1x32xf32> to vector<16x32xf32>
    %96 = arith.mulf %93, %95 : vector<16x32xf32>
    %c5 = arith.constant 5 : index
    %c0_40 = arith.constant 0 : index
    %97 = vector.load %arg8[%c5, %c0_40] : memref<6x32xf32, #tpu.memory_space<vmem>>, vector<1x32xf32>
    %98 = vector.broadcast %97 : vector<1x32xf32> to vector<16x32xf32>
    %99 = arith.addf %96, %98 : vector<16x32xf32>
    %c0_41 = arith.constant 0 : index
    %c0_42 = arith.constant 0 : index
    %100 = vector.load %arg9[%c0_41, %c0_42] : memref<16x32xf32, #tpu.memory_space<vmem>>, vector<16x32xf32>
    tpu.vector_store %arg9[%c0_41, %c0_42], %99 {strides = array<i32>} : memref<16x32xf32, #tpu.memory_space<vmem>>, vector<16x32xf32>,
    return
  }
  func.func @transform_0(%arg0: i32) -> (i32, i32) {
    %c0_i32 = arith.constant 0 : i32
    %c0_i32_0 = arith.constant 0 : i32
    %c0_i32_1 = arith.constant 0 : i32
    return %c0_i32, %c0_i32_0 : i32, i32
  }
  func.func @transform_1(%arg0: i32) -> (i32, i32) {
    %c0_i32 = arith.constant 0 : i32
    %c0_i32_0 = arith.constant 0 : i32
    %c0_i32_1 = arith.constant 0 : i32
    return %c0_i32, %c0_i32_0 : i32, i32
  }
  func.func @transform_2(%arg0: i32) -> (i32, i32) {
    %c0_i32 = arith.constant 0 : i32
    %c0_i32_0 = arith.constant 0 : i32
    %c0_i32_1 = arith.constant 0 : i32
    return %c0_i32, %c0_i32_0 : i32, i32
  }
  func.func @transform_3(%arg0: i32) -> (i32, i32) {
    %c0_i32 = arith.constant 0 : i32
    %c0_i32_0 = arith.constant 0 : i32
    %c0_i32_1 = arith.constant 0 : i32
    return %c0_i32, %c0_i32_0 : i32, i32
  }
  func.func @transform_4(%arg0: i32) -> (i32, i32) {
    %c0_i32 = arith.constant 0 : i32
    %c0_i32_0 = arith.constant 0 : i32
    %c0_i32_1 = arith.constant 0 : i32
    return %c0_i32, %c0_i32_0 : i32, i32
  }
  func.func @transform_5(%arg0: i32) -> (i32, i32) {
    %c0_i32 = arith.constant 0 : i32
    %c0_i32_0 = arith.constant 0 : i32
    %c0_i32_1 = arith.constant 0 : i32
    return %c0_i32, %c0_i32_0 : i32, i32
  }
  func.func @transform_6(%arg0: i32) -> (i32, i32) {
    %c0_i32 = arith.constant 0 : i32
    %c0_i32_0 = arith.constant 0 : i32
    %c0_i32_1 = arith.constant 0 : i32
    return %c0_i32, %c0_i32_0 : i32, i32
  }
  func.func @transform_7(%arg0: i32) -> (i32, i32) {
    %c0_i32 = arith.constant 0 : i32
    %c0_i32_0 = arith.constant 0 : i32
    %c0_i32_1 = arith.constant 0 : i32
    return %c0_i32, %c0_i32_0 : i32, i32
  }
  func.func @transform_8(%arg0: i32) -> (i32, i32) {
    %c0_i32 = arith.constant 0 : i32
    %c0_i32_0 = arith.constant 0 : i32
    %c0_i32_1 = arith.constant 0 : i32
    return %c0_i32, %c0_i32_0 : i32, i32
  }
}

</mosaic_0001>

<llo_original>
// kernel: encoder_layer.1
$region0: #{encoder_layer.1}
  #allocation0 [shape = 'u32[]', space=smem, size = 0x4, offset = 0x4, fixed_abs, tag = 'smem constant byte address 0x4 - core index']
  #allocation1 [shape = 'u32[144,128]{1,0:T(1,128)}', space=vmem, size = 0x12000, scoped, tag = 'internal scratch']
  %s0 = inlined_call_operand.vmem [shape: f32[16,32], index: 0, kind: input, shape index: {}]
  %s1 = inlined_call_operand.vmem [shape: f32[16,16], index: 1, kind: input, shape index: {}]
  %s2 = inlined_call_operand.vmem [shape: f32[32,96], index: 2, kind: input, shape index: {}]
  %s3 = inlined_call_operand.vmem [shape: f32[32,32], index: 3, kind: input, shape index: {}]
  %s4 = inlined_call_operand.vmem [shape: f32[32,64], index: 4, kind: input, shape index: {}]
  %s5 = inlined_call_operand.vmem [shape: f32[64,32], index: 5, kind: input, shape index: {}]
  %s6 = inlined_call_operand.vmem [shape: f32[2,96], index: 6, kind: input, shape index: {}]
  %s7 = inlined_call_operand.vmem [shape: f32[6,32], index: 7, kind: input, shape index: {}]
  %s8 = inlined_call_operand.hbm [shape: f32[16,32], index: 8, kind: output, shape index: {}]
  %s9 = sld [smem:[#allocation0]]
  $region42: #{encoder_layer.1} parent=0
    _
  %s11 = ssub.s32 1, %s9
  %s12 = scalar_select 0, %s11, %s9
  $region1: #{encoder_layer.1} parent=0
    #allocation2 [shape = 'u8[8192]{0}', space=vmem, size = 0x2000, scoped, tag = 'output window, operand 0, single buffered']
    #allocation3 [shape = 's32[1]{0}', space=sflag, size = 0x4, scoped, tag = 'scoped memory for encoder_layer.1']
    %13 = vsyncpa [#allocation3], 0
    // Predicated region
    $region2: #{encoder_layer.1} parent=1 // pred_check
      _
    $region3: #{encoder_layer.1} parent=1 // pred_check_branch
      %15 = sbr.rel (0) target = $region5
    $region4: #{encoder_layer.1} parent=1 // pred_region
      _
    $region5: #{encoder_layer.1} parent=1 // pred_fallthru
      _
    // Predicated region
    $region6: #{encoder_layer.1} parent=1 // pred_check
      _
    $region7: #{encoder_layer.1} parent=1 // pred_check_branch
      %17 = sbr.rel (0) target = $region9
    $region8: #{encoder_layer.1} parent=1 // pred_region
      _
    $region9: #{encoder_layer.1} parent=1 // pred_fallthru
      _
    // Predicated region
    $region10: #{encoder_layer.1} parent=1 // pred_check
      _
    $region11: #{encoder_layer.1} parent=1 // pred_check_branch
      %19 = sbr.rel (0) target = $region13
    $region12: #{encoder_layer.1} parent=1 // pred_region
      _
    $region13: #{encoder_layer.1} parent=1 // pred_fallthru
      _
    // Predicated region
    $region14: #{encoder_layer.1} parent=1 // pred_check
      _
    $region15: #{encoder_layer.1} parent=1 // pred_check_branch
      %21 = sbr.rel (0) target = $region17
    $region16: #{encoder_layer.1} parent=1 // pred_region
      _
    $region17: #{encoder_layer.1} parent=1 // pred_fallthru
      _
    // Predicated region
    $region18: #{encoder_layer.1} parent=1 // pred_check
      _
    $region19: #{encoder_layer.1} parent=1 // pred_check_branch
      %23 = sbr.rel (0) target = $region21
    $region20: #{encoder_layer.1} parent=1 // pred_region
      _
    $region21: #{encoder_layer.1} parent=1 // pred_fallthru
      _
    // Predicated region
    $region22: #{encoder_layer.1} parent=1 // pred_check
      _
    $region23: #{encoder_layer.1} parent=1 // pred_check_branch
      %25 = sbr.rel (0) target = $region25
    $region24: #{encoder_layer.1} parent=1 // pred_region
      _
    $region25: #{encoder_layer.1} parent=1 // pred_fallthru
      _
    // Predicated region
    $region26: #{encoder_layer.1} parent=1 // pred_check
      _
    $region27: #{encoder_layer.1} parent=1 // pred_check_branch
      %27 = sbr.rel (0) target = $region29
    $region28: #{encoder_layer.1} parent=1 // pred_region
      _
    $region29: #{encoder_layer.1} parent=1 // pred_fallthru
      _
    // Predicated region
    $region30: #{encoder_layer.1} parent=1 // pred_check
      _
    $region31: #{encoder_layer.1} parent=1 // pred_check_branch
      %29 = sbr.rel (0) target = $region33
    $region32: #{encoder_layer.1} parent=1 // pred_region
      _
    $region33: #{encoder_layer.1} parent=1 // pred_fallthru
      _
    %v30 = vld [vmem:[%s0] sm:$0xff]
    %v31 = vld [vmem:[%s0 + $0x8] sm:$0xff]
    %v32 = vld [vmem:[%s2] sm:$0xff]
    %v33 = vld [vmem:[%s2 + $0x8] sm:$0xff]
    %v34 = vld [vmem:[%s2 + $0x10] sm:$0xff]
    %v35 = vld [vmem:[%s2 + $0x18] sm:$0xff]
    %v36 = vld [vmem:[%s6] sm:$0x1]
    %v37 = vlaneseq
    %v38 = vshrl.u32 %v37, 7
    %v39 = vsub.s32 0, %v38
    %v40 = vrot.slane %v36, %v39
    %vm41 = vcmask 261120
    %v43 = vsel %vm41, %v30, 0
    %v46 = vsel %vm41, %v31, 0
    %48 = vmatprep.subr.mxu0 0.0
    %49 = vmatpush1.msra.mxu0 %v32
    %50 = vmatprep.subr.mxu0 0.0
    %51 = vmatpush1.msra.mxu0 %v33
    %52 = vmatprep.subr.mxu0 0.0
    %53 = vmatpush1.msra.mxu0 %v34
    %54 = vmatprep.subr.mxu0 0.0
    %55 = vmatpush1.msra.mxu0 %v35
    %56 = vmatprep.subr.mxu0 0.0
    %57 = vmatpush1.msra.mxu0 0.0
    %58 = vmatprep.subr.mxu0 0.0
    %59 = vmatpush1.msra.mxu0 0.0
    %60 = vmatprep.subr.mxu0 0.0
    %61 = vmatpush1.msra.mxu0 0.0
    %62 = vmatprep.subr.mxu0 0.0
    %63 = vmatpush1.msra.mxu0 0.0
    %64 = vmatprep.subr.mxu0 0.0
    %65 = vmatpush1.msra.mxu0 0.0
    %66 = vmatprep.subr.mxu0 0.0
    %67 = vmatpush1.msra.mxu0 0.0
    %68 = vmatprep.subr.mxu0 0.0
    %69 = vmatpush1.msra.mxu0 0.0
    %70 = vmatprep.subr.mxu0 0.0
    %71 = vmatpush1.msra.mxu0 0.0
    %72 = vmatprep.subr.mxu0 0.0
    %73 = vmatpush1.msra.mxu0 0.0
    %74 = vmatprep.subr.mxu0 0.0
    %75 = vmatpush1.msra.mxu0 0.0
    %76 = vmatprep.subr.mxu0 0.0
    %77 = vmatpush1.msra.mxu0 0.0
    %78 = vmatprep.subr.mxu0 0.0
    %79 = vmatpush1.msra.mxu0 0.0
    %80 = vmatprep.subr.mxu0 0.0
    %81 = vmatpush1.msra.mxu0 0.0
    %82 = vmatprep.subr.mxu0 0.0
    %83 = vmatpush1.msra.mxu0 0.0
    %84 = vmatprep.subr.mxu0 0.0
    %85 = vmatpush1.msra.mxu0 0.0
    %86 = vmatprep.subr.mxu0 0.0
    %87 = vmatpush1.msra.mxu0 0.0
    %88 = vmatprep.subr.mxu0 0.0
    %89 = vmatpush1.msra.mxu0 0.0
    %90 = vmatprep.subr.mxu0 0.0
    %91 = vmatpush1.msra.mxu0 0.0
    %92 = vmatprep.subr.mxu0 0.0
    %93 = vmatpush1.msra.mxu0 0.0
    %94 = vmatprep.subr.mxu0 0.0
    %95 = vmatpush1.msra.mxu0 0.0
    %96 = vmatprep.subr.mxu0 0.0
    %97 = vmatpush1.msra.mxu0 0.0
    %98 = vmatprep.subr.mxu0 0.0
    %99 = vmatpush1.msra.mxu0 0.0
    %100 = vmatprep.subr.mxu0 0.0
    %101 = vmatpush1.msra.mxu0 0.0
    %102 = vmatprep.subr.mxu0 0.0
    %103 = vmatpush1.msra.mxu0 0.0
    %104 = vmatprep.subr.mxu0 0.0
    %105 = vmatpush1.msra.mxu0 0.0
    %106 = vmatprep.subr.mxu0 0.0
    %107 = vmatpush1.msra.mxu0 0.0
    %108 = vmatprep.subr.mxu0 0.0
    %109 = vmatpush1.msra.mxu0 0.0
    %110 = vmatprep.subr.mxu0 0.0
    %111 = vmatpush1.msra.mxu0 0.0
    %112 = vmatprep.mubr.f32.mxu0 0.0
    %113 = vmatmul.mubr.f32.gmra.mrb[0].mxu0 %v43
    %v114 = vpop.f32.mrb[0].mxu0
    %v115 = vadd.f32 %v40, %v114
    %v116 = vpop.f32.mrb[0].mxu0
    %117 = vmatprep.mubr.f32.mxu0 0.0
    %118 = vmatmul.mubr.f32.gmra.mrb[0].mxu0 %v46
    %v119 = vpop.f32.mrb[0].mxu0
    %v120 = vadd.f32 %v40, %v119
    %v121 = vpop.f32.mrb[0].mxu0
    %122 = vdwg.mxu0
    %125 = vrot.lane.b32.xlu0 %v115, 120
    %v126 = vpop.permute.xlu0 %125
    %127 = vrot.lane.b32.xlu0 %v120, 120
    %v128 = vpop.permute.xlu0 %127
    %131 = vrot.lane.b32.xlu0 %v115, 112
    %v132 = vpop.permute.xlu0 %131
    %133 = vrot.lane.b32.xlu0 %v120, 112
    %v134 = vpop.permute.xlu0 %133
    %137 = vrot.lane.b32.xlu0 %v115, 104
    %v138 = vpop.permute.xlu0 %137
    %139 = vrot.lane.b32.xlu0 %v120, 104
    %v140 = vpop.permute.xlu0 %139
    %143 = vrot.lane.b32.xlu0 %v115, 96
    %v144 = vpop.permute.xlu0 %143
    %145 = vrot.lane.b32.xlu0 %v120, 96
    %v146 = vpop.permute.xlu0 %145
    %149 = vrot.lane.b32.xlu0 %v115, 88
    %v150 = vpop.permute.xlu0 %149
    %151 = vrot.lane.b32.xlu0 %v120, 88
    %v152 = vpop.permute.xlu0 %151
    %155 = vrot.lane.b32.xlu0 %v115, 80
    %v156 = vpop.permute.xlu0 %155
    %157 = vrot.lane.b32.xlu0 %v120, 80
    %v158 = vpop.permute.xlu0 %157
    %161 = vrot.lane.b32.xlu0 %v115, 72
    %v162 = vpop.permute.xlu0 %161
    %163 = vrot.lane.b32.xlu0 %v120, 72
    %v164 = vpop.permute.xlu0 %163
    %167 = vrot.lane.b32.xlu0 %v115, 64
    %v168 = vpop.permute.xlu0 %167
    %169 = vrot.lane.b32.xlu0 %v120, 64
    %v170 = vpop.permute.xlu0 %169
    %173 = vrot.lane.b32.xlu0 %v115, 56
    %v174 = vpop.permute.xlu0 %173
    %175 = vrot.lane.b32.xlu0 %v120, 56
    %v176 = vpop.permute.xlu0 %175
    %179 = vrot.lane.b32.xlu0 %v115, 48
    %v180 = vpop.permute.xlu0 %179
    %181 = vrot.lane.b32.xlu0 %v120, 48
    %v182 = vpop.permute.xlu0 %181
    %185 = vrot.lane.b32.xlu0 %v115, 40
    %v186 = vpop.permute.xlu0 %185
    %187 = vrot.lane.b32.xlu0 %v120, 40
    %v188 = vpop.permute.xlu0 %187
    %v191 = vcombine.low %v115, %v132
    %v192 = vcombine.high %v115, %v132
    %v194 = vunpack.c.l.s4 1983009808
    %v195 = vunpack.c.0.s8 %v194
    %v196 = vlaneseq
    %v197 = vshrl.u32 %v196, 7
    %v198 = vsub.s32 %v195, %v197
    %v199 = vrot.slane %v191, %v198
    %v201 = vunpack.c.l.s4 1983009808
    %v202 = vunpack.c.0.s8 %v201
    %v203 = vlaneseq
    %v204 = vshrl.u32 %v203, 7
    %v205 = vsub.s32 %v202, %v204
    %v206 = vrot.slane %v192, %v205
    %v207 = vcombine.low %v126, %v138
    %v208 = vcombine.high %v126, %v138
    %v210 = vunpack.c.l.s4 1983009808
    %v211 = vunpack.c.0.s8 %v210
    %v212 = vlaneseq
    %v213 = vshrl.u32 %v212, 7
    %v214 = vsub.s32 %v211, %v213
    %v215 = vrot.slane %v207, %v214
    %v217 = vunpack.c.l.s4 1983009808
    %v218 = vunpack.c.0.s8 %v217
    %v219 = vlaneseq
    %v220 = vshrl.u32 %v219, 7
    %v221 = vsub.s32 %v218, %v220
    %v222 = vrot.slane %v208, %v221
    %v223 = vcombine.low %v144, %v156
    %v224 = vcombine.high %v144, %v156
    %v226 = vunpack.c.l.s4 1983009808
    %v227 = vunpack.c.0.s8 %v226
    %v228 = vlaneseq
    %v229 = vshrl.u32 %v228, 7
    %v230 = vsub.s32 %v227, %v229
    %v231 = vrot.slane %v223, %v230
    %v233 = vunpack.c.l.s4 1983009808
    %v234 = vunpack.c.0.s8 %v233
    %v235 = vlaneseq
    %v236 = vshrl.u32 %v235, 7
    %v237 = vsub.s32 %v234, %v236
    %v238 = vrot.slane %v224, %v237
    %v239 = vcombine.low %v150, %v162
    %v240 = vcombine.high %v150, %v162
    %v242 = vunpack.c.l.s4 1983009808
    %v243 = vunpack.c.0.s8 %v242
    %v244 = vlaneseq
    %v245 = vshrl.u32 %v244, 7
    %v246 = vsub.s32 %v243, %v245
    %v247 = vrot.slane %v239, %v246
    %v249 = vunpack.c.l.s4 1983009808
    %v250 = vunpack.c.0.s8 %v249
    %v251 = vlaneseq
    %v252 = vshrl.u32 %v251, 7
    %v253 = vsub.s32 %v250, %v252
    %v254 = vrot.slane %v240, %v253
    %v255 = vcombine.low %v199, %v215
    %v256 = vcombine.high %v199, %v215
    %v258 = vunpack.c.l.s4 1934713408
    %v259 = vunpack.c.0.s8 %v258
    %v260 = vlaneseq
    %v261 = vshrl.u32 %v260, 7
    %v262 = vsub.s32 %v259, %v261
    %v263 = vrot.slane %v255, %v262
    %v265 = vunpack.c.l.s4 1934713408
    %v266 = vunpack.c.0.s8 %v265
    %v267 = vlaneseq
    %v268 = vshrl.u32 %v267, 7
    %v269 = vsub.s32 %v266, %v268
    %v270 = vrot.slane %v256, %v269
    %v271 = vcombine.low %v206, %v222
    %v272 = vcombine.high %v206, %v222
    %v274 = vunpack.c.l.s4 1934713408
    %v275 = vunpack.c.0.s8 %v274
    %v276 = vlaneseq
    %v277 = vshrl.u32 %v276, 7
    %v278 = vsub.s32 %v275, %v277
    %v279 = vrot.slane %v271, %v278
    %v281 = vunpack.c.l.s4 1934713408
    %v282 = vunpack.c.0.s8 %v281
    %v283 = vlaneseq
    %v284 = vshrl.u32 %v283, 7
    %v285 = vsub.s32 %v282, %v284
    %v286 = vrot.slane %v272, %v285
    %v287 = vcombine.low %v231, %v247
    %v288 = vcombine.high %v231, %v247
    %v290 = vunpack.c.l.s4 1934713408
    %v291 = vunpack.c.0.s8 %v290
    %v292 = vlaneseq
    %v293 = vshrl.u32 %v292, 7
    %v294 = vsub.s32 %v291, %v293
    %v295 = vrot.slane %v287, %v294
    %v297 = vunpack.c.l.s4 1934713408
    %v298 = vunpack.c.0.s8 %v297
    %v299 = vlaneseq
    %v300 = vshrl.u32 %v299, 7
    %v301 = vsub.s32 %v298, %v300
    %v302 = vrot.slane %v288, %v301
    %v303 = vcombine.low %v238, %v254
    %v304 = vcombine.high %v238, %v254
    %v306 = vunpack.c.l.s4 1934713408
    %v307 = vunpack.c.0.s8 %v306
    %v308 = vlaneseq
    %v309 = vshrl.u32 %v308, 7
    %v310 = vsub.s32 %v307, %v309
    %v311 = vrot.slane %v303, %v310
    %v313 = vunpack.c.l.s4 1934713408
    %v314 = vunpack.c.0.s8 %v313
    %v315 = vlaneseq
    %v316 = vshrl.u32 %v315, 7
    %v317 = vsub.s32 %v314, %v316
    %v318 = vrot.slane %v304, %v317
    %v319 = vcombine.low %v263, %v295
    %v320 = vcombine.high %v263, %v295
    %v321 = vcombine.low %v270, %v302
    %v322 = vcombine.high %v270, %v302
    %v323 = vcombine.low %v279, %v311
    %v324 = vcombine.high %v279, %v311
    %v325 = vcombine.low %v286, %v318
    %v326 = vcombine.high %v286, %v318
    %v327 = vcombine.low %v168, %v180
    %v328 = vcombine.high %v168, %v180
    %v330 = vunpack.c.l.s4 1983009808
    %v331 = vunpack.c.0.s8 %v330
    %v332 = vlaneseq
    %v333 = vshrl.u32 %v332, 7
    %v334 = vsub.s32 %v331, %v333
    %v335 = vrot.slane %v327, %v334
    %v337 = vunpack.c.l.s4 1983009808
    %v338 = vunpack.c.0.s8 %v337
    %v339 = vlaneseq
    %v340 = vshrl.u32 %v339, 7
    %v341 = vsub.s32 %v338, %v340
    %v342 = vrot.slane %v328, %v341
    %v343 = vcombine.low %v174, %v186
    %v344 = vcombine.high %v174, %v186
    %v346 = vunpack.c.l.s4 1983009808
    %v347 = vunpack.c.0.s8 %v346
    %v348 = vlaneseq
    %v349 = vshrl.u32 %v348, 7
    %v350 = vsub.s32 %v347, %v349
    %v351 = vrot.slane %v343, %v350
    %v353 = vunpack.c.l.s4 1983009808
    %v354 = vunpack.c.0.s8 %v353
    %v355 = vlaneseq
    %v356 = vshrl.u32 %v355, 7
    %v357 = vsub.s32 %v354, %v356
    %v358 = vrot.slane %v344, %v357
    %v359 = vcombine.low %v335, %v351
    %v360 = vcombine.high %v335, %v351
    %v362 = vunpack.c.l.s4 1934713408
    %v363 = vunpack.c.0.s8 %v362
    %v364 = vlaneseq
    %v365 = vshrl.u32 %v364, 7
    %v366 = vsub.s32 %v363, %v365
    %v367 = vrot.slane %v359, %v366
    %v369 = vunpack.c.l.s4 1934713408
    %v370 = vunpack.c.0.s8 %v369
    %v371 = vlaneseq
    %v372 = vshrl.u32 %v371, 7
    %v373 = vsub.s32 %v370, %v372
    %v374 = vrot.slane %v360, %v373
    %v375 = vcombine.low %v342, %v358
    %v376 = vcombine.high %v342, %v358
    %v378 = vunpack.c.l.s4 1934713408
    %v379 = vunpack.c.0.s8 %v378
    %v380 = vlaneseq
    %v381 = vshrl.u32 %v380, 7
    %v382 = vsub.s32 %v379, %v381
    %v383 = vrot.slane %v375, %v382
    %v385 = vunpack.c.l.s4 1934713408
    %v386 = vunpack.c.0.s8 %v385
    %v387 = vlaneseq
    %v388 = vshrl.u32 %v387, 7
    %v389 = vsub.s32 %v386, %v388
    %v390 = vrot.slane %v376, %v389
    %v391 = vcombine.high %v367, 0.0
    %v392 = vcombine.high %v374, 0.0
    %v393 = vcombine.high %v383, 0.0
    %v394 = vcombine.high %v390, 0.0
    %v395 = vcombine.low %v120, %v134
    %v396 = vcombine.high %v120, %v134
    %v398 = vunpack.c.l.s4 1983009808
    %v399 = vunpack.c.0.s8 %v398
    %v400 = vlaneseq
    %v401 = vshrl.u32 %v400, 7
    %v402 = vsub.s32 %v399, %v401
    %v403 = vrot.slane %v395, %v402
    %v405 = vunpack.c.l.s4 1983009808
    %v406 = vunpack.c.0.s8 %v405
    %v407 = vlaneseq
    %v408 = vshrl.u32 %v407, 7
    %v409 = vsub.s32 %v406, %v408
    %v410 = vrot.slane %v396, %v409
    %v411 = vcombine.low %v128, %v140
    %v412 = vcombine.high %v128, %v140
    %v414 = vunpack.c.l.s4 1983009808
    %v415 = vunpack.c.0.s8 %v414
    %v416 = vlaneseq
    %v417 = vshrl.u32 %v416, 7
    %v418 = vsub.s32 %v415, %v417
    %v419 = vrot.slane %v411, %v418
    %v421 = vunpack.c.l.s4 1983009808
    %v422 = vunpack.c.0.s8 %v421
    %v423 = vlaneseq
    %v424 = vshrl.u32 %v423, 7
    %v425 = vsub.s32 %v422, %v424
    %v426 = vrot.slane %v412, %v425
    %v427 = vcombine.low %v146, %v158
    %v428 = vcombine.high %v146, %v158
    %v430 = vunpack.c.l.s4 1983009808
    %v431 = vunpack.c.0.s8 %v430
    %v432 = vlaneseq
    %v433 = vshrl.u32 %v432, 7
    %v434 = vsub.s32 %v431, %v433
    %v435 = vrot.slane %v427, %v434
    %v437 = vunpack.c.l.s4 1983009808
    %v438 = vunpack.c.0.s8 %v437
    %v439 = vlaneseq
    %v440 = vshrl.u32 %v439, 7
    %v441 = vsub.s32 %v438, %v440
    %v442 = vrot.slane %v428, %v441
    %v443 = vcombine.low %v152, %v164
    %v444 = vcombine.high %v152, %v164
    %v446 = vunpack.c.l.s4 1983009808
    %v447 = vunpack.c.0.s8 %v446
    %v448 = vlaneseq
    %v449 = vshrl.u32 %v448, 7
    %v450 = vsub.s32 %v447, %v449
    %v451 = vrot.slane %v443, %v450
    %v453 = vunpack.c.l.s4 1983009808
    %v454 = vunpack.c.0.s8 %v453
    %v455 = vlaneseq
    %v456 = vshrl.u32 %v455, 7
    %v457 = vsub.s32 %v454, %v456
    %v458 = vrot.slane %v444, %v457
    %v459 = vcombine.low %v403, %v419
    %v460 = vcombine.high %v403, %v419
    %v462 = vunpack.c.l.s4 1934713408
    %v463 = vunpack.c.0.s8 %v462
    %v464 = vlaneseq
    %v465 = vshrl.u32 %v464, 7
    %v466 = vsub.s32 %v463, %v465
    %v467 = vrot.slane %v459, %v466
    %v469 = vunpack.c.l.s4 1934713408
    %v470 = vunpack.c.0.s8 %v469
    %v471 = vlaneseq
    %v472 = vshrl.u32 %v471, 7
    %v473 = vsub.s32 %v470, %v472
    %v474 = vrot.slane %v460, %v473
    %v475 = vcombine.low %v410, %v426
    %v476 = vcombine.high %v410, %v426
    %v478 = vunpack.c.l.s4 1934713408
    %v479 = vunpack.c.0.s8 %v478
    %v480 = vlaneseq
    %v481 = vshrl.u32 %v480, 7
    %v482 = vsub.s32 %v479, %v481
    %v483 = vrot.slane %v475, %v482
    %v485 = vunpack.c.l.s4 1934713408
    %v486 = vunpack.c.0.s8 %v485
    %v487 = vlaneseq
    %v488 = vshrl.u32 %v487, 7
    %v489 = vsub.s32 %v486, %v488
    %v490 = vrot.slane %v476, %v489
    %v491 = vcombine.low %v435, %v451
    %v492 = vcombine.high %v435, %v451
    %v494 = vunpack.c.l.s4 1934713408
    %v495 = vunpack.c.0.s8 %v494
    %v496 = vlaneseq
    %v497 = vshrl.u32 %v496, 7
    %v498 = vsub.s32 %v495, %v497
    %v499 = vrot.slane %v491, %v498
    %v501 = vunpack.c.l.s4 1934713408
    %v502 = vunpack.c.0.s8 %v501
    %v503 = vlaneseq
    %v504 = vshrl.u32 %v503, 7
    %v505 = vsub.s32 %v502, %v504
    %v506 = vrot.slane %v492, %v505
    %v507 = vcombine.low %v442, %v458
    %v508 = vcombine.high %v442, %v458
    %v510 = vunpack.c.l.s4 1934713408
    %v511 = vunpack.c.0.s8 %v510
    %v512 = vlaneseq
    %v513 = vshrl.u32 %v512, 7
    %v514 = vsub.s32 %v511, %v513
    %v515 = vrot.slane %v507, %v514
    %v517 = vunpack.c.l.s4 1934713408
    %v518 = vunpack.c.0.s8 %v517
    %v519 = vlaneseq
    %v520 = vshrl.u32 %v519, 7
    %v521 = vsub.s32 %v518, %v520
    %v522 = vrot.slane %v508, %v521
    %v523 = vcombine.low %v467, %v499
    %v524 = vcombine.high %v467, %v499
    %v525 = vcombine.low %v474, %v506
    %v526 = vcombine.high %v474, %v506
    %v527 = vcombine.low %v483, %v515
    %v528 = vcombine.high %v483, %v515
    %v529 = vcombine.low %v490, %v522
    %v530 = vcombine.high %v490, %v522
    %v531 = vcombine.low %v170, %v182
    %v532 = vcombine.high %v170, %v182
    %v534 = vunpack.c.l.s4 1983009808
    %v535 = vunpack.c.0.s8 %v534
    %v536 = vlaneseq
    %v537 = vshrl.u32 %v536, 7
    %v538 = vsub.s32 %v535, %v537
    %v539 = vrot.slane %v531, %v538
    %v541 = vunpack.c.l.s4 1983009808
    %v542 = vunpack.c.0.s8 %v541
    %v543 = vlaneseq
    %v544 = vshrl.u32 %v543, 7
    %v545 = vsub.s32 %v542, %v544
    %v546 = vrot.slane %v532, %v545
    %v547 = vcombine.low %v176, %v188
    %v548 = vcombine.high %v176, %v188
    %v550 = vunpack.c.l.s4 1983009808
    %v551 = vunpack.c.0.s8 %v550
    %v552 = vlaneseq
    %v553 = vshrl.u32 %v552, 7
    %v554 = vsub.s32 %v551, %v553
    %v555 = vrot.slane %v547, %v554
    %v557 = vunpack.c.l.s4 1983009808
    %v558 = vunpack.c.0.s8 %v557
    %v559 = vlaneseq
    %v560 = vshrl.u32 %v559, 7
    %v561 = vsub.s32 %v558, %v560
    %v562 = vrot.slane %v548, %v561
    %v563 = vcombine.low %v539, %v555
    %v564 = vcombine.high %v539, %v555
    %v566 = vunpack.c.l.s4 1934713408
    %v567 = vunpack.c.0.s8 %v566
    %v568 = vlaneseq
    %v569 = vshrl.u32 %v568, 7
    %v570 = vsub.s32 %v567, %v569
    %v571 = vrot.slane %v563, %v570
    %v573 = vunpack.c.l.s4 1934713408
    %v574 = vunpack.c.0.s8 %v573
    %v575 = vlaneseq
    %v576 = vshrl.u32 %v575, 7
    %v577 = vsub.s32 %v574, %v576
    %v578 = vrot.slane %v564, %v577
    %v579 = vcombine.low %v546, %v562
    %v580 = vcombine.high %v546, %v562
    %v582 = vunpack.c.l.s4 1934713408
    %v583 = vunpack.c.0.s8 %v582
    %v584 = vlaneseq
    %v585 = vshrl.u32 %v584, 7
    %v586 = vsub.s32 %v583, %v585
    %v587 = vrot.slane %v579, %v586
    %v589 = vunpack.c.l.s4 1934713408
    %v590 = vunpack.c.0.s8 %v589
    %v591 = vlaneseq
    %v592 = vshrl.u32 %v591, 7
    %v593 = vsub.s32 %v590, %v592
    %v594 = vrot.slane %v580, %v593
    %v595 = vcombine.high %v571, 0.0
    %v596 = vcombine.high %v578, 0.0
    %v597 = vcombine.high %v587, 0.0
    %v598 = vcombine.high %v594, 0.0
    %v599 = vcombine.low %v319, %v321
    %v600 = vcombine.high %v319, %v321
    %v602 = vunpack.c.l.s4 1983009808
    %v603 = vunpack.c.0.s8 %v602
    %v604 = vlaneseq
    %v605 = vshrl.u32 %v604, 7
    %v606 = vsub.s32 %v603, %v605
    %v607 = vrot.slane %v599, %v606
    %v609 = vunpack.c.l.s4 1983009808
    %v610 = vunpack.c.0.s8 %v609
    %v611 = vlaneseq
    %v612 = vshrl.u32 %v611, 7
    %v613 = vsub.s32 %v610, %v612
    %v614 = vrot.slane %v600, %v613
    %v615 = vcombine.low %v320, %v322
    %v616 = vcombine.high %v320, %v322
    %v618 = vunpack.c.l.s4 1983009808
    %v619 = vunpack.c.0.s8 %v618
    %v620 = vlaneseq
    %v621 = vshrl.u32 %v620, 7
    %v622 = vsub.s32 %v619, %v621
    %v623 = vrot.slane %v615, %v622
    %v625 = vunpack.c.l.s4 1983009808
    %v626 = vunpack.c.0.s8 %v625
    %v627 = vlaneseq
    %v628 = vshrl.u32 %v627, 7
    %v629 = vsub.s32 %v626, %v628
    %v630 = vrot.slane %v616, %v629
    %v631 = vcombine.low %v323, %v325
    %v632 = vcombine.high %v323, %v325
    %v634 = vunpack.c.l.s4 1983009808
    %v635 = vunpack.c.0.s8 %v634
    %v636 = vlaneseq
    %v637 = vshrl.u32 %v636, 7
    %v638 = vsub.s32 %v635, %v637
    %v639 = vrot.slane %v631, %v638
    %v641 = vunpack.c.l.s4 1983009808
    %v642 = vunpack.c.0.s8 %v641
    %v643 = vlaneseq
    %v644 = vshrl.u32 %v643, 7
    %v645 = vsub.s32 %v642, %v644
    %v646 = vrot.slane %v632, %v645
    %v647 = vcombine.low %v324, %v326
    %v648 = vcombine.high %v324, %v326
    %v650 = vunpack.c.l.s4 1983009808
    %v651 = vunpack.c.0.s8 %v650
    %v652 = vlaneseq
    %v653 = vshrl.u32 %v652, 7
    %v654 = vsub.s32 %v651, %v653
    %v655 = vrot.slane %v647, %v654
    %v657 = vunpack.c.l.s4 1983009808
    %v658 = vunpack.c.0.s8 %v657
    %v659 = vlaneseq
    %v660 = vshrl.u32 %v659, 7
    %v661 = vsub.s32 %v658, %v660
    %v662 = vrot.slane %v648, %v661
    %v663 = vcombine.low %v607, %v623
    %v664 = vcombine.high %v607, %v623
    %v666 = vunpack.c.l.s4 1934713408
    %v667 = vunpack.c.0.s8 %v666
    %v668 = vlaneseq
    %v669 = vshrl.u32 %v668, 7
    %v670 = vsub.s32 %v667, %v669
    %v671 = vrot.slane %v663, %v670
    %v673 = vunpack.c.l.s4 1934713408
    %v674 = vunpack.c.0.s8 %v673
    %v675 = vlaneseq
    %v676 = vshrl.u32 %v675, 7
    %v677 = vsub.s32 %v674, %v676
    %v678 = vrot.slane %v664, %v677
    %v679 = vcombine.low %v614, %v630
    %v680 = vcombine.high %v614, %v630
    %v682 = vunpack.c.l.s4 1934713408
    %v683 = vunpack.c.0.s8 %v682
    %v684 = vlaneseq
    %v685 = vshrl.u32 %v684, 7
    %v686 = vsub.s32 %v683, %v685
    %v687 = vrot.slane %v679, %v686
    %v689 = vunpack.c.l.s4 1934713408
    %v690 = vunpack.c.0.s8 %v689
    %v691 = vlaneseq
    %v692 = vshrl.u32 %v691, 7
    %v693 = vsub.s32 %v690, %v692
    %v694 = vrot.slane %v680, %v693
    %v695 = vcombine.low %v639, %v655
    %v696 = vcombine.high %v639, %v655
    %v698 = vunpack.c.l.s4 1934713408
    %v699 = vunpack.c.0.s8 %v698
    %v700 = vlaneseq
    %v701 = vshrl.u32 %v700, 7
    %v702 = vsub.s32 %v699, %v701
    %v703 = vrot.slane %v695, %v702
    %v705 = vunpack.c.l.s4 1934713408
    %v706 = vunpack.c.0.s8 %v705
    %v707 = vlaneseq
    %v708 = vshrl.u32 %v707, 7
    %v709 = vsub.s32 %v706, %v708
    %v710 = vrot.slane %v696, %v709
    %v711 = vcombine.low %v646, %v662
    %v712 = vcombine.high %v646, %v662
    %v714 = vunpack.c.l.s4 1934713408
    %v715 = vunpack.c.0.s8 %v714
    %v716 = vlaneseq
    %v717 = vshrl.u32 %v716, 7
    %v718 = vsub.s32 %v715, %v717
    %v719 = vrot.slane %v711, %v718
    %v721 = vunpack.c.l.s4 1934713408
    %v722 = vunpack.c.0.s8 %v721
    %v723 = vlaneseq
    %v724 = vshrl.u32 %v723, 7
    %v725 = vsub.s32 %v722, %v724
    %v726 = vrot.slane %v712, %v725
    %v727 = vcombine.low %v671, %v703
    %v728 = vcombine.high %v671, %v703
    %v729 = vcombine.low %v678, %v710
    %v730 = vcombine.high %v678, %v710
    %v731 = vcombine.low %v687, %v719
    %v732 = vcombine.high %v687, %v719
    %v733 = vcombine.low %v694, %v726
    %v734 = vcombine.high %v694, %v726
    %v735 = vcombine.low %v523, %v525
    %v736 = vcombine.high %v523, %v525
    %v738 = vunpack.c.l.s4 1983009808
    %v739 = vunpack.c.0.s8 %v738
    %v740 = vlaneseq
    %v741 = vshrl.u32 %v740, 7
    %v742 = vsub.s32 %v739, %v741
    %v743 = vrot.slane %v735, %v742
    %v745 = vunpack.c.l.s4 1983009808
    %v746 = vunpack.c.0.s8 %v745
    %v747 = vlaneseq
    %v748 = vshrl.u32 %v747, 7
    %v749 = vsub.s32 %v746, %v748
    %v750 = vrot.slane %v736, %v749
    %v751 = vcombine.low %v524, %v526
    %v752 = vcombine.high %v524, %v526
    %v754 = vunpack.c.l.s4 1983009808
    %v755 = vunpack.c.0.s8 %v754
    %v756 = vlaneseq
    %v757 = vshrl.u32 %v756, 7
    %v758 = vsub.s32 %v755, %v757
    %v759 = vrot.slane %v751, %v758
    %v761 = vunpack.c.l.s4 1983009808
    %v762 = vunpack.c.0.s8 %v761
    %v763 = vlaneseq
    %v764 = vshrl.u32 %v763, 7
    %v765 = vsub.s32 %v762, %v764
    %v766 = vrot.slane %v752, %v765
    %v767 = vcombine.low %v527, %v529
    %v768 = vcombine.high %v527, %v529
    %v770 = vunpack.c.l.s4 1983009808
    %v771 = vunpack.c.0.s8 %v770
    %v772 = vlaneseq
    %v773 = vshrl.u32 %v772, 7
    %v774 = vsub.s32 %v771, %v773
    %v775 = vrot.slane %v767, %v774
    %v777 = vunpack.c.l.s4 1983009808
    %v778 = vunpack.c.0.s8 %v777
    %v779 = vlaneseq
    %v780 = vshrl.u32 %v779, 7
    %v781 = vsub.s32 %v778, %v780
    %v782 = vrot.slane %v768, %v781
    %v783 = vcombine.low %v528, %v530
    %v784 = vcombine.high %v528, %v530
    %v786 = vunpack.c.l.s4 1983009808
    %v787 = vunpack.c.0.s8 %v786
    %v788 = vlaneseq
    %v789 = vshrl.u32 %v788, 7
    %v790 = vsub.s32 %v787, %v789
    %v791 = vrot.slane %v783, %v790
    %v793 = vunpack.c.l.s4 1983009808
    %v794 = vunpack.c.0.s8 %v793
    %v795 = vlaneseq
    %v796 = vshrl.u32 %v795, 7
    %v797 = vsub.s32 %v794, %v796
    %v798 = vrot.slane %v784, %v797
    %v799 = vcombine.low %v743, %v759
    %v800 = vcombine.high %v743, %v759
    %v802 = vunpack.c.l.s4 1934713408
    %v803 = vunpack.c.0.s8 %v802
    %v804 = vlaneseq
    %v805 = vshrl.u32 %v804, 7
    %v806 = vsub.s32 %v803, %v805
    %v807 = vrot.slane %v799, %v806
    %v809 = vunpack.c.l.s4 1934713408
    %v810 = vunpack.c.0.s8 %v809
    %v811 = vlaneseq
    %v812 = vshrl.u32 %v811, 7
    %v813 = vsub.s32 %v810, %v812
    %v814 = vrot.slane %v800, %v813
    %v815 = vcombine.low %v750, %v766
    %v816 = vcombine.high %v750, %v766
    %v818 = vunpack.c.l.s4 1934713408
    %v819 = vunpack.c.0.s8 %v818
    %v820 = vlaneseq
    %v821 = vshrl.u32 %v820, 7
    %v822 = vsub.s32 %v819, %v821
    %v823 = vrot.slane %v815, %v822
    %v825 = vunpack.c.l.s4 1934713408
    %v826 = vunpack.c.0.s8 %v825
    %v827 = vlaneseq
    %v828 = vshrl.u32 %v827, 7
    %v829 = vsub.s32 %v826, %v828
    %v830 = vrot.slane %v816, %v829
    %v831 = vcombine.low %v775, %v791
    %v832 = vcombine.high %v775, %v791
    %v834 = vunpack.c.l.s4 1934713408
    %v835 = vunpack.c.0.s8 %v834
    %v836 = vlaneseq
    %v837 = vshrl.u32 %v836, 7
    %v838 = vsub.s32 %v835, %v837
    %v839 = vrot.slane %v831, %v838
    %v841 = vunpack.c.l.s4 1934713408
    %v842 = vunpack.c.0.s8 %v841
    %v843 = vlaneseq
    %v844 = vshrl.u32 %v843, 7
    %v845 = vsub.s32 %v842, %v844
    %v846 = vrot.slane %v832, %v845
    %v847 = vcombine.low %v782, %v798
    %v848 = vcombine.high %v782, %v798
    %v850 = vunpack.c.l.s4 1934713408
    %v851 = vunpack.c.0.s8 %v850
    %v852 = vlaneseq
    %v853 = vshrl.u32 %v852, 7
    %v854 = vsub.s32 %v851, %v853
    %v855 = vrot.slane %v847, %v854
    %v857 = vunpack.c.l.s4 1934713408
    %v858 = vunpack.c.0.s8 %v857
    %v859 = vlaneseq
    %v860 = vshrl.u32 %v859, 7
    %v861 = vsub.s32 %v858, %v860
    %v862 = vrot.slane %v848, %v861
    %v863 = vcombine.low %v807, %v839
    %v864 = vcombine.high %v807, %v839
    %v865 = vcombine.low %v814, %v846
    %v866 = vcombine.high %v814, %v846
    %v867 = vcombine.low %v823, %v855
    %v868 = vcombine.high %v823, %v855
    %v869 = vcombine.low %v830, %v862
    %v870 = vcombine.high %v830, %v862
    %v871 = vcombine.low %v367, %v374
    %v873 = vunpack.c.l.s4 1983009808
    %v874 = vunpack.c.0.s8 %v873
    %v875 = vlaneseq
    %v876 = vshrl.u32 %v875, 7
    %v877 = vsub.s32 %v874, %v876
    %v878 = vrot.slane %v871, %v877
    %v879 = vcombine.low %v391, %v392
    %v881 = vunpack.c.l.s4 1983009808
    %v882 = vunpack.c.0.s8 %v881
    %v883 = vlaneseq
    %v884 = vshrl.u32 %v883, 7
    %v885 = vsub.s32 %v882, %v884
    %v886 = vrot.slane %v879, %v885
    %v887 = vcombine.low %v383, %v390
    %v889 = vunpack.c.l.s4 1983009808
    %v890 = vunpack.c.0.s8 %v889
    %v891 = vlaneseq
    %v892 = vshrl.u32 %v891, 7
    %v893 = vsub.s32 %v890, %v892
    %v894 = vrot.slane %v887, %v893
    %v895 = vcombine.low %v393, %v394
    %v897 = vunpack.c.l.s4 1983009808
    %v898 = vunpack.c.0.s8 %v897
    %v899 = vlaneseq
    %v900 = vshrl.u32 %v899, 7
    %v901 = vsub.s32 %v898, %v900
    %v902 = vrot.slane %v895, %v901
    %v903 = vcombine.low %v878, %v886
    %v904 = vcombine.high %v878, %v886
    %v906 = vunpack.c.l.s4 1934713408
    %v907 = vunpack.c.0.s8 %v906
    %v908 = vlaneseq
    %v909 = vshrl.u32 %v908, 7
    %v910 = vsub.s32 %v907, %v909
    %v911 = vrot.slane %v903, %v910
    %v913 = vunpack.c.l.s4 1934713408
    %v914 = vunpack.c.0.s8 %v913
    %v915 = vlaneseq
    %v916 = vshrl.u32 %v915, 7
    %v917 = vsub.s32 %v914, %v916
    %v918 = vrot.slane %v904, %v917
    %v919 = vcombine.low %v894, %v902
    %v920 = vcombine.high %v894, %v902
    %v922 = vunpack.c.l.s4 1934713408
    %v923 = vunpack.c.0.s8 %v922
    %v924 = vlaneseq
    %v925 = vshrl.u32 %v924, 7
    %v926 = vsub.s32 %v923, %v925
    %v927 = vrot.slane %v919, %v926
    %v929 = vunpack.c.l.s4 1934713408
    %v930 = vunpack.c.0.s8 %v929
    %v931 = vlaneseq
    %v932 = vshrl.u32 %v931, 7
    %v933 = vsub.s32 %v930, %v932
    %v934 = vrot.slane %v920, %v933
    %v935 = vcombine.low %v911, %v927
    %v936 = vcombine.high %v911, %v927
    %v937 = vcombine.low %v918, %v934
    %v938 = vcombine.high %v918, %v934
    %v939 = vcombine.low %v571, %v578
    %v941 = vunpack.c.l.s4 1983009808
    %v942 = vunpack.c.0.s8 %v941
    %v943 = vlaneseq
    %v944 = vshrl.u32 %v943, 7
    %v945 = vsub.s32 %v942, %v944
    %v946 = vrot.slane %v939, %v945
    %v947 = vcombine.low %v595, %v596
    %v949 = vunpack.c.l.s4 1983009808
    %v950 = vunpack.c.0.s8 %v949
    %v951 = vlaneseq
    %v952 = vshrl.u32 %v951, 7
    %v953 = vsub.s32 %v950, %v952
    %v954 = vrot.slane %v947, %v953
    %v955 = vcombine.low %v587, %v594
    %v957 = vunpack.c.l.s4 1983009808
    %v958 = vunpack.c.0.s8 %v957
    %v959 = vlaneseq
    %v960 = vshrl.u32 %v959, 7
    %v961 = vsub.s32 %v958, %v960
    %v962 = vrot.slane %v955, %v961
    %v963 = vcombine.low %v597, %v598
    %v965 = vunpack.c.l.s4 1983009808
    %v966 = vunpack.c.0.s8 %v965
    %v967 = vlaneseq
    %v968 = vshrl.u32 %v967, 7
    %v969 = vsub.s32 %v966, %v968
    %v970 = vrot.slane %v963, %v969
    %v971 = vcombine.low %v946, %v954
    %v972 = vcombine.high %v946, %v954
    %v974 = vunpack.c.l.s4 1934713408
    %v975 = vunpack.c.0.s8 %v974
    %v976 = vlaneseq
    %v977 = vshrl.u32 %v976, 7
    %v978 = vsub.s32 %v975, %v977
    %v979 = vrot.slane %v971, %v978
    %v981 = vunpack.c.l.s4 1934713408
    %v982 = vunpack.c.0.s8 %v981
    %v983 = vlaneseq
    %v984 = vshrl.u32 %v983, 7
    %v985 = vsub.s32 %v982, %v984
    %v986 = vrot.slane %v972, %v985
    %v987 = vcombine.low %v962, %v970
    %v988 = vcombine.high %v962, %v970
    %v990 = vunpack.c.l.s4 1934713408
    %v991 = vunpack.c.0.s8 %v990
    %v992 = vlaneseq
    %v993 = vshrl.u32 %v992, 7
    %v994 = vsub.s32 %v991, %v993
    %v995 = vrot.slane %v987, %v994
    %v997 = vunpack.c.l.s4 1934713408
    %v998 = vunpack.c.0.s8 %v997
    %v999 = vlaneseq
    %v1000 = vshrl.u32 %v999, 7
    %v1001 = vsub.s32 %v998, %v1000
    %v1002 = vrot.slane %v988, %v1001
    %v1003 = vcombine.low %v979, %v995
    %v1004 = vcombine.high %v979, %v995
    %v1005 = vcombine.low %v986, %v1002
    %v1006 = vcombine.high %v986, %v1002
    %v1007 = vld [vmem:[%s1] sm:$0xff]
    %v1008 = vld [vmem:[%s1 + $0x8] sm:$0xff]
    %vm1009 = vcmask 64512
    %v1011 = vsel %vm1009, %v727, 0
    %v1014 = vsel %vm1009, %v863, 0
    %v1017 = vsel %vm1009, %v731, 0
    %v1020 = vsel %vm1009, %v867, 0
    %1022 = vmatprep.subr.mxu0 0.0
    %1023 = vmatpush1.xpose.msra.mxu0 %v1017
    %1024 = vmatprep.subr.mxu0 0.0
    %1025 = vmatpush1.xpose.msra.mxu0 %v1020
    %1026 = vmatprep.subr.mxu0 0.0
    %1027 = vmatpush1.xpose.msra.mxu0 0.0
    %1028 = vmatprep.subr.mxu0 0.0
    %1029 = vmatpush1.xpose.msra.mxu0 0.0
    %1030 = vmatprep.subr.mxu0 0.0
    %1031 = vmatpush1.xpose.msra.mxu0 0.0
    %1032 = vmatprep.subr.mxu0 0.0
    %1033 = vmatpush1.xpose.msra.mxu0 0.0
    %1034 = vmatprep.subr.mxu0 0.0
    %1035 = vmatpush1.xpose.msra.mxu0 0.0
    %1036 = vmatprep.subr.mxu0 0.0
    %1037 = vmatpush1.xpose.msra.mxu0 0.0
    %1038 = vmatprep.subr.mxu0 0.0
    %1039 = vmatpush1.xpose.msra.mxu0 0.0
    %1040 = vmatprep.subr.mxu0 0.0
    %1041 = vmatpush1.xpose.msra.mxu0 0.0
    %1042 = vmatprep.subr.mxu0 0.0
    %1043 = vmatpush1.xpose.msra.mxu0 0.0
    %1044 = vmatprep.subr.mxu0 0.0
    %1045 = vmatpush1.xpose.msra.mxu0 0.0
    %1046 = vmatprep.subr.mxu0 0.0
    %1047 = vmatpush1.xpose.msra.mxu0 0.0
    %1048 = vmatprep.subr.mxu0 0.0
    %1049 = vmatpush1.xpose.msra.mxu0 0.0
    %1050 = vmatprep.subr.mxu0 0.0
    %1051 = vmatpush1.xpose.msra.mxu0 0.0
    %1052 = vmatprep.subr.mxu0 0.0
    %1053 = vmatpush1.xpose.msra.mxu0 0.0
    %1054 = vmatprep.subr.mxu0 0.0
    %1055 = vmatpush1.xpose.msra.mxu0 0.0
    %1056 = vmatprep.subr.mxu0 0.0
    %1057 = vmatpush1.xpose.msra.mxu0 0.0
    %1058 = vmatprep.subr.mxu0 0.0
    %1059 = vmatpush1.xpose.msra.mxu0 0.0
    %1060 = vmatprep.subr.mxu0 0.0
    %1061 = vmatpush1.xpose.msra.mxu0 0.0
    %1062 = vmatprep.subr.mxu0 0.0
    %1063 = vmatpush1.xpose.msra.mxu0 0.0
    %1064 = vmatprep.subr.mxu0 0.0
    %1065 = vmatpush1.xpose.msra.mxu0 0.0
    %1066 = vmatprep.subr.mxu0 0.0
    %1067 = vmatpush1.xpose.msra.mxu0 0.0
    %1068 = vmatprep.subr.mxu0 0.0
    %1069 = vmatpush1.xpose.msra.mxu0 0.0
    %1070 = vmatprep.subr.mxu0 0.0
    %1071 = vmatpush1.xpose.msra.mxu0 0.0
    %1072 = vmatprep.subr.mxu0 0.0
    %1073 = vmatpush1.xpose.msra.mxu0 0.0
    %1074 = vmatprep.subr.mxu0 0.0
    %1075 = vmatpush1.xpose.msra.mxu0 0.0
    %1076 = vmatprep.subr.mxu0 0.0
    %1077 = vmatpush1.xpose.msra.mxu0 0.0
    %1078 = vmatprep.subr.mxu0 0.0
    %1079 = vmatpush1.xpose.msra.mxu0 0.0
    %1080 = vmatprep.subr.mxu0 0.0
    %1081 = vmatpush1.xpose.msra.mxu0 0.0
    %1082 = vmatprep.subr.mxu0 0.0
    %1083 = vmatpush1.xpose.msra.mxu0 0.0
    %1084 = vmatprep.subr.mxu0 0.0
    %1085 = vmatpush1.xpose.msra.mxu0 0.0
    %1086 = vmatprep.mubr.f32.mxu0 0.0
    %1087 = vmatmul.mubr.f32.gmra.mrb[0].mxu0 %v1011
    %v1088 = vpop.f32.mrb[0].mxu0
    %v1089 = vadd.f32 %v1007, %v1088
    %v1090 = vpop.f32.mrb[0].mxu0
    %1091 = vmatprep.mubr.f32.mxu0 0.0
    %1092 = vmatmul.mubr.f32.gmra.mrb[0].mxu0 %v1014
    %v1093 = vpop.f32.mrb[0].mxu0
    %v1094 = vadd.f32 %v1008, %v1093
    %v1095 = vpop.f32.mrb[0].mxu0
    %1096 = vdwg.mxu0
    %v1098 = vsel %vm1009, %v728, 0
    %v1101 = vsel %vm1009, %v864, 0
    %v1104 = vsel %vm1009, %v732, 0
    %v1107 = vsel %vm1009, %v868, 0
    %1109 = vmatprep.subr.mxu0 0.0
    %1110 = vmatpush1.xpose.msra.mxu0 %v1104
    %1111 = vmatprep.subr.mxu0 0.0
    %1112 = vmatpush1.xpose.msra.mxu0 %v1107
    %1113 = vmatprep.subr.mxu0 0.0
    %1114 = vmatpush1.xpose.msra.mxu0 0.0
    %1115 = vmatprep.subr.mxu0 0.0
    %1116 = vmatpush1.xpose.msra.mxu0 0.0
    %1117 = vmatprep.subr.mxu0 0.0
    %1118 = vmatpush1.xpose.msra.mxu0 0.0
    %1119 = vmatprep.subr.mxu0 0.0
    %1120 = vmatpush1.xpose.msra.mxu0 0.0
    %1121 = vmatprep.subr.mxu0 0.0
    %1122 = vmatpush1.xpose.msra.mxu0 0.0
    %1123 = vmatprep.subr.mxu0 0.0
    %1124 = vmatpush1.xpose.msra.mxu0 0.0
    %1125 = vmatprep.subr.mxu0 0.0
    %1126 = vmatpush1.xpose.msra.mxu0 0.0
    %1127 = vmatprep.subr.mxu0 0.0
    %1128 = vmatpush1.xpose.msra.mxu0 0.0
    %1129 = vmatprep.subr.mxu0 0.0
    %1130 = vmatpush1.xpose.msra.mxu0 0.0
    %1131 = vmatprep.subr.mxu0 0.0
    %1132 = vmatpush1.xpose.msra.mxu0 0.0
    %1133 = vmatprep.subr.mxu0 0.0
    %1134 = vmatpush1.xpose.msra.mxu0 0.0
    %1135 = vmatprep.subr.mxu0 0.0
    %1136 = vmatpush1.xpose.msra.mxu0 0.0
    %1137 = vmatprep.subr.mxu0 0.0
    %1138 = vmatpush1.xpose.msra.mxu0 0.0
    %1139 = vmatprep.subr.mxu0 0.0
    %1140 = vmatpush1.xpose.msra.mxu0 0.0
    %1141 = vmatprep.subr.mxu0 0.0
    %1142 = vmatpush1.xpose.msra.mxu0 0.0
    %1143 = vmatprep.subr.mxu0 0.0
    %1144 = vmatpush1.xpose.msra.mxu0 0.0
    %1145 = vmatprep.subr.mxu0 0.0
    %1146 = vmatpush1.xpose.msra.mxu0 0.0
    %1147 = vmatprep.subr.mxu0 0.0
    %1148 = vmatpush1.xpose.msra.mxu0 0.0
    %1149 = vmatprep.subr.mxu0 0.0
    %1150 = vmatpush1.xpose.msra.mxu0 0.0
    %1151 = vmatprep.subr.mxu0 0.0
    %1152 = vmatpush1.xpose.msra.mxu0 0.0
    %1153 = vmatprep.subr.mxu0 0.0
    %1154 = vmatpush1.xpose.msra.mxu0 0.0
    %1155 = vmatprep.subr.mxu0 0.0
    %1156 = vmatpush1.xpose.msra.mxu0 0.0
    %1157 = vmatprep.subr.mxu0 0.0
    %1158 = vmatpush1.xpose.msra.mxu0 0.0
    %1159 = vmatprep.subr.mxu0 0.0
    %1160 = vmatpush1.xpose.msra.mxu0 0.0
    %1161 = vmatprep.subr.mxu0 0.0
    %1162 = vmatpush1.xpose.msra.mxu0 0.0
    %1163 = vmatprep.subr.mxu0 0.0
    %1164 = vmatpush1.xpose.msra.mxu0 0.0
    %1165 = vmatprep.subr.mxu0 0.0
    %1166 = vmatpush1.xpose.msra.mxu0 0.0
    %1167 = vmatprep.subr.mxu0 0.0
    %1168 = vmatpush1.xpose.msra.mxu0 0.0
    %1169 = vmatprep.subr.mxu0 0.0
    %1170 = vmatpush1.xpose.msra.mxu0 0.0
    %1171 = vmatprep.subr.mxu0 0.0
    %1172 = vmatpush1.xpose.msra.mxu0 0.0
    %1173 = vmatprep.mubr.f32.mxu0 0.0
    %1174 = vmatmul.mubr.f32.gmra.mrb[0].mxu0 %v1098
    %v1175 = vpop.f32.mrb[0].mxu0
    %v1176 = vadd.f32 %v1007, %v1175
    %v1177 = vpop.f32.mrb[0].mxu0
    %1178 = vmatprep.mubr.f32.mxu0 0.0
    %1179 = vmatmul.mubr.f32.gmra.mrb[0].mxu0 %v1101
    %v1180 = vpop.f32.mrb[0].mxu0
    %v1181 = vadd.f32 %v1008, %v1180
    %v1182 = vpop.f32.mrb[0].mxu0
    %1183 = vdwg.mxu0
    %v1185 = vsel %vm1009, %v729, 0
    %v1188 = vsel %vm1009, %v865, 0
    %v1191 = vsel %vm1009, %v733, 0
    %v1194 = vsel %vm1009, %v869, 0
    %1196 = vmatprep.subr.mxu0 0.0
    %1197 = vmatpush1.xpose.msra.mxu0 %v1191
    %1198 = vmatprep.subr.mxu0 0.0
    %1199 = vmatpush1.xpose.msra.mxu0 %v1194
    %1200 = vmatprep.subr.mxu0 0.0
    %1201 = vmatpush1.xpose.msra.mxu0 0.0
    %1202 = vmatprep.subr.mxu0 0.0
    %1203 = vmatpush1.xpose.msra.mxu0 0.0
    %1204 = vmatprep.subr.mxu0 0.0
    %1205 = vmatpush1.xpose.msra.mxu0 0.0
    %1206 = vmatprep.subr.mxu0 0.0
    %1207 = vmatpush1.xpose.msra.mxu0 0.0
    %1208 = vmatprep.subr.mxu0 0.0
    %1209 = vmatpush1.xpose.msra.mxu0 0.0
    %1210 = vmatprep.subr.mxu0 0.0
    %1211 = vmatpush1.xpose.msra.mxu0 0.0
    %1212 = vmatprep.subr.mxu0 0.0
    %1213 = vmatpush1.xpose.msra.mxu0 0.0
    %1214 = vmatprep.subr.mxu0 0.0
    %1215 = vmatpush1.xpose.msra.mxu0 0.0
    %1216 = vmatprep.subr.mxu0 0.0
    %1217 = vmatpush1.xpose.msra.mxu0 0.0
    %1218 = vmatprep.subr.mxu0 0.0
    %1219 = vmatpush1.xpose.msra.mxu0 0.0
    %1220 = vmatprep.subr.mxu0 0.0
    %1221 = vmatpush1.xpose.msra.mxu0 0.0
    %1222 = vmatprep.subr.mxu0 0.0
    %1223 = vmatpush1.xpose.msra.mxu0 0.0
    %1224 = vmatprep.subr.mxu0 0.0
    %1225 = vmatpush1.xpose.msra.mxu0 0.0
    %1226 = vmatprep.subr.mxu0 0.0
    %1227 = vmatpush1.xpose.msra.mxu0 0.0
    %1228 = vmatprep.subr.mxu0 0.0
    %1229 = vmatpush1.xpose.msra.mxu0 0.0
    %1230 = vmatprep.subr.mxu0 0.0
    %1231 = vmatpush1.xpose.msra.mxu0 0.0
    %1232 = vmatprep.subr.mxu0 0.0
    %1233 = vmatpush1.xpose.msra.mxu0 0.0
    %1234 = vmatprep.subr.mxu0 0.0
    %1235 = vmatpush1.xpose.msra.mxu0 0.0
    %1236 = vmatprep.subr.mxu0 0.0
    %1237 = vmatpush1.xpose.msra.mxu0 0.0
    %1238 = vmatprep.subr.mxu0 0.0
    %1239 = vmatpush1.xpose.msra.mxu0 0.0
    %1240 = vmatprep.subr.mxu0 0.0
    %1241 = vmatpush1.xpose.msra.mxu0 0.0
    %1242 = vmatprep.subr.mxu0 0.0
    %1243 = vmatpush1.xpose.msra.mxu0 0.0
    %1244 = vmatprep.subr.mxu0 0.0
    %1245 = vmatpush1.xpose.msra.mxu0 0.0
    %1246 = vmatprep.subr.mxu0 0.0
    %1247 = vmatpush1.xpose.msra.mxu0 0.0
    %1248 = vmatprep.subr.mxu0 0.0
    %1249 = vmatpush1.xpose.msra.mxu0 0.0
    %1250 = vmatprep.subr.mxu0 0.0
    %1251 = vmatpush1.xpose.msra.mxu0 0.0
    %1252 = vmatprep.subr.mxu0 0.0
    %1253 = vmatpush1.xpose.msra.mxu0 0.0
    %1254 = vmatprep.subr.mxu0 0.0
    %1255 = vmatpush1.xpose.msra.mxu0 0.0
    %1256 = vmatprep.subr.mxu0 0.0
    %1257 = vmatpush1.xpose.msra.mxu0 0.0
    %1258 = vmatprep.subr.mxu0 0.0
    %1259 = vmatpush1.xpose.msra.mxu0 0.0
    %1260 = vmatprep.mubr.f32.mxu0 0.0
    %1261 = vmatmul.mubr.f32.gmra.mrb[0].mxu0 %v1185
    %v1262 = vpop.f32.mrb[0].mxu0
    %v1263 = vadd.f32 %v1007, %v1262
    %v1264 = vpop.f32.mrb[0].mxu0
    %1265 = vmatprep.mubr.f32.mxu0 0.0
    %1266 = vmatmul.mubr.f32.gmra.mrb[0].mxu0 %v1188
    %v1267 = vpop.f32.mrb[0].mxu0
    %v1268 = vadd.f32 %v1008, %v1267
    %v1269 = vpop.f32.mrb[0].mxu0
    %1270 = vdwg.mxu0
    %v1272 = vsel %vm1009, %v730, 0
    %v1275 = vsel %vm1009, %v866, 0
    %v1278 = vsel %vm1009, %v734, 0
    %v1281 = vsel %vm1009, %v870, 0
    %1283 = vmatprep.subr.mxu0 0.0
    %1284 = vmatpush1.xpose.msra.mxu0 %v1278
    %1285 = vmatprep.subr.mxu0 0.0
    %1286 = vmatpush1.xpose.msra.mxu0 %v1281
    %1287 = vmatprep.subr.mxu0 0.0
    %1288 = vmatpush1.xpose.msra.mxu0 0.0
    %1289 = vmatprep.subr.mxu0 0.0
    %1290 = vmatpush1.xpose.msra.mxu0 0.0
    %1291 = vmatprep.subr.mxu0 0.0
    %1292 = vmatpush1.xpose.msra.mxu0 0.0
    %1293 = vmatprep.subr.mxu0 0.0
    %1294 = vmatpush1.xpose.msra.mxu0 0.0
    %1295 = vmatprep.subr.mxu0 0.0
    %1296 = vmatpush1.xpose.msra.mxu0 0.0
    %1297 = vmatprep.subr.mxu0 0.0
    %1298 = vmatpush1.xpose.msra.mxu0 0.0
    %1299 = vmatprep.subr.mxu0 0.0
    %1300 = vmatpush1.xpose.msra.mxu0 0.0
    %1301 = vmatprep.subr.mxu0 0.0
    %1302 = vmatpush1.xpose.msra.mxu0 0.0
    %1303 = vmatprep.subr.mxu0 0.0
    %1304 = vmatpush1.xpose.msra.mxu0 0.0
    %1305 = vmatprep.subr.mxu0 0.0
    %1306 = vmatpush1.xpose.msra.mxu0 0.0
    %1307 = vmatprep.subr.mxu0 0.0
    %1308 = vmatpush1.xpose.msra.mxu0 0.0
    %1309 = vmatprep.subr.mxu0 0.0
    %1310 = vmatpush1.xpose.msra.mxu0 0.0
    %1311 = vmatprep.subr.mxu0 0.0
    %1312 = vmatpush1.xpose.msra.mxu0 0.0
    %1313 = vmatprep.subr.mxu0 0.0
    %1314 = vmatpush1.xpose.msra.mxu0 0.0
    %1315 = vmatprep.subr.mxu0 0.0
    %1316 = vmatpush1.xpose.msra.mxu0 0.0
    %1317 = vmatprep.subr.mxu0 0.0
    %1318 = vmatpush1.xpose.msra.mxu0 0.0
    %1319 = vmatprep.subr.mxu0 0.0
    %1320 = vmatpush1.xpose.msra.mxu0 0.0
    %1321 = vmatprep.subr.mxu0 0.0
    %1322 = vmatpush1.xpose.msra.mxu0 0.0
    %1323 = vmatprep.subr.mxu0 0.0
    %1324 = vmatpush1.xpose.msra.mxu0 0.0
    %1325 = vmatprep.subr.mxu0 0.0
    %1326 = vmatpush1.xpose.msra.mxu0 0.0
    %1327 = vmatprep.subr.mxu0 0.0
    %1328 = vmatpush1.xpose.msra.mxu0 0.0
    %1329 = vmatprep.subr.mxu0 0.0
    %1330 = vmatpush1.xpose.msra.mxu0 0.0
    %1331 = vmatprep.subr.mxu0 0.0
    %1332 = vmatpush1.xpose.msra.mxu0 0.0
    %1333 = vmatprep.subr.mxu0 0.0
    %1334 = vmatpush1.xpose.msra.mxu0 0.0
    %1335 = vmatprep.subr.mxu0 0.0
    %1336 = vmatpush1.xpose.msra.mxu0 0.0
    %1337 = vmatprep.subr.mxu0 0.0
    %1338 = vmatpush1.xpose.msra.mxu0 0.0
    %1339 = vmatprep.subr.mxu0 0.0
    %1340 = vmatpush1.xpose.msra.mxu0 0.0
    %1341 = vmatprep.subr.mxu0 0.0
    %1342 = vmatpush1.xpose.msra.mxu0 0.0
    %1343 = vmatprep.subr.mxu0 0.0
    %1344 = vmatpush1.xpose.msra.mxu0 0.0
    %1345 = vmatprep.subr.mxu0 0.0
    %1346 = vmatpush1.xpose.msra.mxu0 0.0
    %1347 = vmatprep.mubr.f32.mxu0 0.0
    %1348 = vmatmul.mubr.f32.gmra.mrb[0].mxu0 %v1272
    %v1349 = vpop.f32.mrb[0].mxu0
    %v1350 = vadd.f32 %v1007, %v1349
    %v1351 = vpop.f32.mrb[0].mxu0
    %1352 = vmatprep.mubr.f32.mxu0 0.0
    %1353 = vmatmul.mubr.f32.gmra.mrb[0].mxu0 %v1275
    %v1354 = vpop.f32.mrb[0].mxu0
    %v1355 = vadd.f32 %v1008, %v1354
    %v1356 = vpop.f32.mrb[0].mxu0
    %1357 = vdwg.mxu0
    %vm1358 = vcmask 130048
    %v1359 = vsel %vm1358, %v1089, -inf
    %1360 = vmax.xlane.f32.xlu0 %v1359
    %v1361 = vpop.xlane.xlu0 %1360
    %v1362 = vsel %vm1358, %v1094, -inf
    %1363 = vmax.xlane.f32.xlu0 %v1362
    %v1364 = vpop.xlane.xlu0 %1363
    %v1365 = vsel %vm1358, %v1176, -inf
    %1366 = vmax.xlane.f32.xlu0 %v1365
    %v1367 = vpop.xlane.xlu0 %1366
    %v1368 = vsel %vm1358, %v1181, -inf
    %1369 = vmax.xlane.f32.xlu0 %v1368
    %v1370 = vpop.xlane.xlu0 %1369
    %v1371 = vsel %vm1358, %v1263, -inf
    %1372 = vmax.xlane.f32.xlu0 %v1371
    %v1373 = vpop.xlane.xlu0 %1372
    %v1374 = vsel %vm1358, %v1268, -inf
    %1375 = vmax.xlane.f32.xlu0 %v1374
    %v1376 = vpop.xlane.xlu0 %1375
    %v1377 = vsel %vm1358, %v1350, -inf
    %1378 = vmax.xlane.f32.xlu0 %v1377
    %v1379 = vpop.xlane.xlu0 %1378
    %v1380 = vsel %vm1358, %v1355, -inf
    %1381 = vmax.xlane.f32.xlu0 %v1380
    %v1382 = vpop.xlane.xlu0 %1381
    %v1383 = vsub.f32 %v1089, %v1361
    %v1384 = vsub.f32 %v1094, %v1364
    %v1385 = vsub.f32 %v1176, %v1367
    %v1386 = vsub.f32 %v1181, %v1370
    %v1387 = vsub.f32 %v1263, %v1373
    %v1388 = vsub.f32 %v1268, %v1376
    %v1389 = vsub.f32 %v1350, %v1379
    %v1390 = vsub.f32 %v1355, %v1382
    %v1391 = vmul.f32 %v1383, 1.442695
    %v1392 = vpow.pop %v1391
    %v1393 = vmul.f32 %v1384, 1.442695
    %v1394 = vpow.pop %v1393
    %v1395 = vmul.f32 %v1385, 1.442695
    %v1396 = vpow.pop %v1395
    %v1397 = vmul.f32 %v1386, 1.442695
    %v1398 = vpow.pop %v1397
    %v1399 = vmul.f32 %v1387, 1.442695
    %v1400 = vpow.pop %v1399
    %v1401 = vmul.f32 %v1388, 1.442695
    %v1402 = vpow.pop %v1401
    %v1403 = vmul.f32 %v1389, 1.442695
    %v1404 = vpow.pop %v1403
    %v1405 = vmul.f32 %v1390, 1.442695
    %v1406 = vpow.pop %v1405
    %v1407 = vsel %vm1358, %v1392, 0.0
    %1408 = vadd.xlane.f32.xlu0 %v1407
    %v1409 = vpop.xlane.xlu0 %1408
    %v1410 = vsel %vm1358, %v1394, 0.0
    %1411 = vadd.xlane.f32.xlu0 %v1410
    %v1412 = vpop.xlane.xlu0 %1411
    %v1413 = vsel %vm1358, %v1396, 0.0
    %1414 = vadd.xlane.f32.xlu0 %v1413
    %v1415 = vpop.xlane.xlu0 %1414
    %v1416 = vsel %vm1358, %v1398, 0.0
    %1417 = vadd.xlane.f32.xlu0 %v1416
    %v1418 = vpop.xlane.xlu0 %1417
    %v1419 = vsel %vm1358, %v1400, 0.0
    %1420 = vadd.xlane.f32.xlu0 %v1419
    %v1421 = vpop.xlane.xlu0 %1420
    %v1422 = vsel %vm1358, %v1402, 0.0
    %1423 = vadd.xlane.f32.xlu0 %v1422
    %v1424 = vpop.xlane.xlu0 %1423
    %v1425 = vsel %vm1358, %v1404, 0.0
    %1426 = vadd.xlane.f32.xlu0 %v1425
    %v1427 = vpop.xlane.xlu0 %1426
    %v1428 = vsel %vm1358, %v1406, 0.0
    %1429 = vadd.xlane.f32.xlu0 %v1428
    %v1430 = vpop.xlane.xlu0 %1429
    %v1431 = vrcp.pop %v1409
    %v1432 = vrcp.pop %v1412
    %v1433 = vrcp.pop %v1415
    %v1434 = vrcp.pop %v1418
    %v1435 = vrcp.pop %v1421
    %v1436 = vrcp.pop %v1424
    %v1437 = vrcp.pop %v1427
    %v1438 = vrcp.pop %v1430
    %v1439 = vmul.f32 %v1409, %v1431
    %v1440 = vmul.f32 %v1412, %v1432
    %v1441 = vmul.f32 %v1415, %v1433
    %v1442 = vmul.f32 %v1418, %v1434
    %v1443 = vmul.f32 %v1421, %v1435
    %v1444 = vmul.f32 %v1424, %v1436
    %v1445 = vmul.f32 %v1427, %v1437
    %v1446 = vmul.f32 %v1430, %v1438
    %v1447 = vsub.f32 2.0, %v1439
    %v1448 = vsub.f32 2.0, %v1440
    %v1449 = vsub.f32 2.0, %v1441
    %v1450 = vsub.f32 2.0, %v1442
    %v1451 = vsub.f32 2.0, %v1443
    %v1452 = vsub.f32 2.0, %v1444
    %v1453 = vsub.f32 2.0, %v1445
    %v1454 = vsub.f32 2.0, %v1446
    %v1455 = vmul.f32 %v1431, %v1447
    %v1456 = vmul.f32 %v1432, %v1448
    %v1457 = vmul.f32 %v1433, %v1449
    %v1458 = vmul.f32 %v1434, %v1450
    %v1459 = vmul.f32 %v1435, %v1451
    %v1460 = vmul.f32 %v1436, %v1452
    %v1461 = vmul.f32 %v1437, %v1453
    %v1462 = vmul.f32 %v1438, %v1454
    %v1463 = vmul.f32 %v1392, %v1455
    %v1464 = vmul.f32 %v1394, %v1456
    %v1465 = vmul.f32 %v1396, %v1457
    %v1466 = vmul.f32 %v1398, %v1458
    %v1467 = vmul.f32 %v1400, %v1459
    %v1468 = vmul.f32 %v1402, %v1460
    %v1469 = vmul.f32 %v1404, %v1461
    %v1470 = vmul.f32 %v1406, %v1462
    %v1472 = vsel %vm1358, %v1463, 0
    %v1475 = vsel %vm1358, %v1464, 0
    %1477 = vmatprep.subr.mxu0 0.0
    %1478 = vmatpush1.msra.mxu0 %v935
    %1479 = vmatprep.subr.mxu0 0.0
    %1480 = vmatpush1.msra.mxu0 %v1003
    %1481 = vmatprep.subr.mxu0 0.0
    %1482 = vmatpush1.msra.mxu0 0.0
    %1483 = vmatprep.subr.mxu0 0.0
    %1484 = vmatpush1.msra.mxu0 0.0
    %1485 = vmatprep.subr.mxu0 0.0
    %1486 = vmatpush1.msra.mxu0 0.0
    %1487 = vmatprep.subr.mxu0 0.0
    %1488 = vmatpush1.msra.mxu0 0.0
    %1489 = vmatprep.subr.mxu0 0.0
    %1490 = vmatpush1.msra.mxu0 0.0
    %1491 = vmatprep.subr.mxu0 0.0
    %1492 = vmatpush1.msra.mxu0 0.0
    %1493 = vmatprep.subr.mxu0 0.0
    %1494 = vmatpush1.msra.mxu0 0.0
    %1495 = vmatprep.subr.mxu0 0.0
    %1496 = vmatpush1.msra.mxu0 0.0
    %1497 = vmatprep.subr.mxu0 0.0
    %1498 = vmatpush1.msra.mxu0 0.0
    %1499 = vmatprep.subr.mxu0 0.0
    %1500 = vmatpush1.msra.mxu0 0.0
    %1501 = vmatprep.subr.mxu0 0.0
    %1502 = vmatpush1.msra.mxu0 0.0
    %1503 = vmatprep.subr.mxu0 0.0
    %1504 = vmatpush1.msra.mxu0 0.0
    %1505 = vmatprep.subr.mxu0 0.0
    %1506 = vmatpush1.msra.mxu0 0.0
    %1507 = vmatprep.subr.mxu0 0.0
    %1508 = vmatpush1.msra.mxu0 0.0
    %1509 = vmatprep.subr.mxu0 0.0
    %1510 = vmatpush1.msra.mxu0 0.0
    %1511 = vmatprep.subr.mxu0 0.0
    %1512 = vmatpush1.msra.mxu0 0.0
    %1513 = vmatprep.subr.mxu0 0.0
    %1514 = vmatpush1.msra.mxu0 0.0
    %1515 = vmatprep.subr.mxu0 0.0
    %1516 = vmatpush1.msra.mxu0 0.0
    %1517 = vmatprep.subr.mxu0 0.0
    %1518 = vmatpush1.msra.mxu0 0.0
    %1519 = vmatprep.subr.mxu0 0.0
    %1520 = vmatpush1.msra.mxu0 0.0
    %1521 = vmatprep.subr.mxu0 0.0
    %1522 = vmatpush1.msra.mxu0 0.0
    %1523 = vmatprep.subr.mxu0 0.0
    %1524 = vmatpush1.msra.mxu0 0.0
    %1525 = vmatprep.subr.mxu0 0.0
    %1526 = vmatpush1.msra.mxu0 0.0
    %1527 = vmatprep.subr.mxu0 0.0
    %1528 = vmatpush1.msra.mxu0 0.0
    %1529 = vmatprep.subr.mxu0 0.0
    %1530 = vmatpush1.msra.mxu0 0.0
    %1531 = vmatprep.subr.mxu0 0.0
    %1532 = vmatpush1.msra.mxu0 0.0
    %1533 = vmatprep.subr.mxu0 0.0
    %1534 = vmatpush1.msra.mxu0 0.0
    %1535 = vmatprep.subr.mxu0 0.0
    %1536 = vmatpush1.msra.mxu0 0.0
    %1537 = vmatprep.subr.mxu0 0.0
    %1538 = vmatpush1.msra.mxu0 0.0
    %1539 = vmatprep.subr.mxu0 0.0
    %1540 = vmatpush1.msra.mxu0 0.0
    %1541 = vmatprep.mubr.f32.mxu0 0.0
    %1542 = vmatmul.mubr.f32.gmra.mrb[0].mxu0 %v1472
    %v1543 = vpop.f32.mrb[0].mxu0
    %v1544 = vadd.f32 0.0, %v1543
    %v1545 = vpop.f32.mrb[0].mxu0
    %1546 = vmatprep.mubr.f32.mxu0 0.0
    %1547 = vmatmul.mubr.f32.gmra.mrb[0].mxu0 %v1475
    %v1548 = vpop.f32.mrb[0].mxu0
    %v1549 = vadd.f32 0.0, %v1548
    %v1550 = vpop.f32.mrb[0].mxu0
    %1551 = vdwg.mxu0
    %v1553 = vsel %vm1358, %v1465, 0
    %v1556 = vsel %vm1358, %v1466, 0
    %1558 = vmatprep.subr.mxu0 0.0
    %1559 = vmatpush1.msra.mxu0 %v936
    %1560 = vmatprep.subr.mxu0 0.0
    %1561 = vmatpush1.msra.mxu0 %v1004
    %1562 = vmatprep.subr.mxu0 0.0
    %1563 = vmatpush1.msra.mxu0 0.0
    %1564 = vmatprep.subr.mxu0 0.0
    %1565 = vmatpush1.msra.mxu0 0.0
    %1566 = vmatprep.subr.mxu0 0.0
    %1567 = vmatpush1.msra.mxu0 0.0
    %1568 = vmatprep.subr.mxu0 0.0
    %1569 = vmatpush1.msra.mxu0 0.0
    %1570 = vmatprep.subr.mxu0 0.0
    %1571 = vmatpush1.msra.mxu0 0.0
    %1572 = vmatprep.subr.mxu0 0.0
    %1573 = vmatpush1.msra.mxu0 0.0
    %1574 = vmatprep.subr.mxu0 0.0
    %1575 = vmatpush1.msra.mxu0 0.0
    %1576 = vmatprep.subr.mxu0 0.0
    %1577 = vmatpush1.msra.mxu0 0.0
    %1578 = vmatprep.subr.mxu0 0.0
    %1579 = vmatpush1.msra.mxu0 0.0
    %1580 = vmatprep.subr.mxu0 0.0
    %1581 = vmatpush1.msra.mxu0 0.0
    %1582 = vmatprep.subr.mxu0 0.0
    %1583 = vmatpush1.msra.mxu0 0.0
    %1584 = vmatprep.subr.mxu0 0.0
    %1585 = vmatpush1.msra.mxu0 0.0
    %1586 = vmatprep.subr.mxu0 0.0
    %1587 = vmatpush1.msra.mxu0 0.0
    %1588 = vmatprep.subr.mxu0 0.0
    %1589 = vmatpush1.msra.mxu0 0.0
    %1590 = vmatprep.subr.mxu0 0.0
    %1591 = vmatpush1.msra.mxu0 0.0
    %1592 = vmatprep.subr.mxu0 0.0
    %1593 = vmatpush1.msra.mxu0 0.0
    %1594 = vmatprep.subr.mxu0 0.0
    %1595 = vmatpush1.msra.mxu0 0.0
    %1596 = vmatprep.subr.mxu0 0.0
    %1597 = vmatpush1.msra.mxu0 0.0
    %1598 = vmatprep.subr.mxu0 0.0
    %1599 = vmatpush1.msra.mxu0 0.0
    %1600 = vmatprep.subr.mxu0 0.0
    %1601 = vmatpush1.msra.mxu0 0.0
    %1602 = vmatprep.subr.mxu0 0.0
    %1603 = vmatpush1.msra.mxu0 0.0
    %1604 = vmatprep.subr.mxu0 0.0
    %1605 = vmatpush1.msra.mxu0 0.0
    %1606 = vmatprep.subr.mxu0 0.0
    %1607 = vmatpush1.msra.mxu0 0.0
    %1608 = vmatprep.subr.mxu0 0.0
    %1609 = vmatpush1.msra.mxu0 0.0
    %1610 = vmatprep.subr.mxu0 0.0
    %1611 = vmatpush1.msra.mxu0 0.0
    %1612 = vmatprep.subr.mxu0 0.0
    %1613 = vmatpush1.msra.mxu0 0.0
    %1614 = vmatprep.subr.mxu0 0.0
    %1615 = vmatpush1.msra.mxu0 0.0
    %1616 = vmatprep.subr.mxu0 0.0
    %1617 = vmatpush1.msra.mxu0 0.0
    %1618 = vmatprep.subr.mxu0 0.0
    %1619 = vmatpush1.msra.mxu0 0.0
    %1620 = vmatprep.subr.mxu0 0.0
    %1621 = vmatpush1.msra.mxu0 0.0
    %1622 = vmatprep.mubr.f32.mxu0 0.0
    %1623 = vmatmul.mubr.f32.gmra.mrb[0].mxu0 %v1553
    %v1624 = vpop.f32.mrb[0].mxu0
    %v1625 = vadd.f32 0.0, %v1624
    %v1626 = vpop.f32.mrb[0].mxu0
    %1627 = vmatprep.mubr.f32.mxu0 0.0
    %1628 = vmatmul.mubr.f32.gmra.mrb[0].mxu0 %v1556
    %v1629 = vpop.f32.mrb[0].mxu0
    %v1630 = vadd.f32 0.0, %v1629
    %v1631 = vpop.f32.mrb[0].mxu0
    %1632 = vdwg.mxu0
    %v1634 = vsel %vm1358, %v1467, 0
    %v1637 = vsel %vm1358, %v1468, 0
    %1639 = vmatprep.subr.mxu0 0.0
    %1640 = vmatpush1.msra.mxu0 %v937
    %1641 = vmatprep.subr.mxu0 0.0
    %1642 = vmatpush1.msra.mxu0 %v1005
    %1643 = vmatprep.subr.mxu0 0.0
    %1644 = vmatpush1.msra.mxu0 0.0
    %1645 = vmatprep.subr.mxu0 0.0
    %1646 = vmatpush1.msra.mxu0 0.0
    %1647 = vmatprep.subr.mxu0 0.0
    %1648 = vmatpush1.msra.mxu0 0.0
    %1649 = vmatprep.subr.mxu0 0.0
    %1650 = vmatpush1.msra.mxu0 0.0
    %1651 = vmatprep.subr.mxu0 0.0
    %1652 = vmatpush1.msra.mxu0 0.0
    %1653 = vmatprep.subr.mxu0 0.0
    %1654 = vmatpush1.msra.mxu0 0.0
    %1655 = vmatprep.subr.mxu0 0.0
    %1656 = vmatpush1.msra.mxu0 0.0
    %1657 = vmatprep.subr.mxu0 0.0
    %1658 = vmatpush1.msra.mxu0 0.0
    %1659 = vmatprep.subr.mxu0 0.0
    %1660 = vmatpush1.msra.mxu0 0.0
    %1661 = vmatprep.subr.mxu0 0.0
    %1662 = vmatpush1.msra.mxu0 0.0
    %1663 = vmatprep.subr.mxu0 0.0
    %1664 = vmatpush1.msra.mxu0 0.0
    %1665 = vmatprep.subr.mxu0 0.0
    %1666 = vmatpush1.msra.mxu0 0.0
    %1667 = vmatprep.subr.mxu0 0.0
    %1668 = vmatpush1.msra.mxu0 0.0
    %1669 = vmatprep.subr.mxu0 0.0
    %1670 = vmatpush1.msra.mxu0 0.0
    %1671 = vmatprep.subr.mxu0 0.0
    %1672 = vmatpush1.msra.mxu0 0.0
    %1673 = vmatprep.subr.mxu0 0.0
    %1674 = vmatpush1.msra.mxu0 0.0
    %1675 = vmatprep.subr.mxu0 0.0
    %1676 = vmatpush1.msra.mxu0 0.0
    %1677 = vmatprep.subr.mxu0 0.0
    %1678 = vmatpush1.msra.mxu0 0.0
    %1679 = vmatprep.subr.mxu0 0.0
    %1680 = vmatpush1.msra.mxu0 0.0
    %1681 = vmatprep.subr.mxu0 0.0
    %1682 = vmatpush1.msra.mxu0 0.0
    %1683 = vmatprep.subr.mxu0 0.0
    %1684 = vmatpush1.msra.mxu0 0.0
    %1685 = vmatprep.subr.mxu0 0.0
    %1686 = vmatpush1.msra.mxu0 0.0
    %1687 = vmatprep.subr.mxu0 0.0
    %1688 = vmatpush1.msra.mxu0 0.0
    %1689 = vmatprep.subr.mxu0 0.0
    %1690 = vmatpush1.msra.mxu0 0.0
    %1691 = vmatprep.subr.mxu0 0.0
    %1692 = vmatpush1.msra.mxu0 0.0
    %1693 = vmatprep.subr.mxu0 0.0
    %1694 = vmatpush1.msra.mxu0 0.0
    %1695 = vmatprep.subr.mxu0 0.0
    %1696 = vmatpush1.msra.mxu0 0.0
    %1697 = vmatprep.subr.mxu0 0.0
    %1698 = vmatpush1.msra.mxu0 0.0
    %1699 = vmatprep.subr.mxu0 0.0
    %1700 = vmatpush1.msra.mxu0 0.0
    %1701 = vmatprep.subr.mxu0 0.0
    %1702 = vmatpush1.msra.mxu0 0.0
    %1703 = vmatprep.mubr.f32.mxu0 0.0
    %1704 = vmatmul.mubr.f32.gmra.mrb[0].mxu0 %v1634
    %v1705 = vpop.f32.mrb[0].mxu0
    %v1706 = vadd.f32 0.0, %v1705
    %v1707 = vpop.f32.mrb[0].mxu0
    %1708 = vmatprep.mubr.f32.mxu0 0.0
    %1709 = vmatmul.mubr.f32.gmra.mrb[0].mxu0 %v1637
    %v1710 = vpop.f32.mrb[0].mxu0
    %v1711 = vadd.f32 0.0, %v1710
    %v1712 = vpop.f32.mrb[0].mxu0
    %1713 = vdwg.mxu0
    %v1715 = vsel %vm1358, %v1469, 0
    %v1718 = vsel %vm1358, %v1470, 0
    %1720 = vmatprep.subr.mxu0 0.0
    %1721 = vmatpush1.msra.mxu0 %v938
    %1722 = vmatprep.subr.mxu0 0.0
    %1723 = vmatpush1.msra.mxu0 %v1006
    %1724 = vmatprep.subr.mxu0 0.0
    %1725 = vmatpush1.msra.mxu0 0.0
    %1726 = vmatprep.subr.mxu0 0.0
    %1727 = vmatpush1.msra.mxu0 0.0
    %1728 = vmatprep.subr.mxu0 0.0
    %1729 = vmatpush1.msra.mxu0 0.0
    %1730 = vmatprep.subr.mxu0 0.0
    %1731 = vmatpush1.msra.mxu0 0.0
    %1732 = vmatprep.subr.mxu0 0.0
    %1733 = vmatpush1.msra.mxu0 0.0
    %1734 = vmatprep.subr.mxu0 0.0
    %1735 = vmatpush1.msra.mxu0 0.0
    %1736 = vmatprep.subr.mxu0 0.0
    %1737 = vmatpush1.msra.mxu0 0.0
    %1738 = vmatprep.subr.mxu0 0.0
    %1739 = vmatpush1.msra.mxu0 0.0
    %1740 = vmatprep.subr.mxu0 0.0
    %1741 = vmatpush1.msra.mxu0 0.0
    %1742 = vmatprep.subr.mxu0 0.0
    %1743 = vmatpush1.msra.mxu0 0.0
    %1744 = vmatprep.subr.mxu0 0.0
    %1745 = vmatpush1.msra.mxu0 0.0
    %1746 = vmatprep.subr.mxu0 0.0
    %1747 = vmatpush1.msra.mxu0 0.0
    %1748 = vmatprep.subr.mxu0 0.0
    %1749 = vmatpush1.msra.mxu0 0.0
    %1750 = vmatprep.subr.mxu0 0.0
    %1751 = vmatpush1.msra.mxu0 0.0
    %1752 = vmatprep.subr.mxu0 0.0
    %1753 = vmatpush1.msra.mxu0 0.0
    %1754 = vmatprep.subr.mxu0 0.0
    %1755 = vmatpush1.msra.mxu0 0.0
    %1756 = vmatprep.subr.mxu0 0.0
    %1757 = vmatpush1.msra.mxu0 0.0
    %1758 = vmatprep.subr.mxu0 0.0
    %1759 = vmatpush1.msra.mxu0 0.0
    %1760 = vmatprep.subr.mxu0 0.0
    %1761 = vmatpush1.msra.mxu0 0.0
    %1762 = vmatprep.subr.mxu0 0.0
    %1763 = vmatpush1.msra.mxu0 0.0
    %1764 = vmatprep.subr.mxu0 0.0
    %1765 = vmatpush1.msra.mxu0 0.0
    %1766 = vmatprep.subr.mxu0 0.0
    %1767 = vmatpush1.msra.mxu0 0.0
    %1768 = vmatprep.subr.mxu0 0.0
    %1769 = vmatpush1.msra.mxu0 0.0
    %1770 = vmatprep.subr.mxu0 0.0
    %1771 = vmatpush1.msra.mxu0 0.0
    %1772 = vmatprep.subr.mxu0 0.0
    %1773 = vmatpush1.msra.mxu0 0.0
    %1774 = vmatprep.subr.mxu0 0.0
    %1775 = vmatpush1.msra.mxu0 0.0
    %1776 = vmatprep.subr.mxu0 0.0
    %1777 = vmatpush1.msra.mxu0 0.0
    %1778 = vmatprep.subr.mxu0 0.0
    %1779 = vmatpush1.msra.mxu0 0.0
    %1780 = vmatprep.subr.mxu0 0.0
    %1781 = vmatpush1.msra.mxu0 0.0
    %1782 = vmatprep.subr.mxu0 0.0
    %1783 = vmatpush1.msra.mxu0 0.0
    %1784 = vmatprep.mubr.f32.mxu0 0.0
    %1785 = vmatmul.mubr.f32.gmra.mrb[0].mxu0 %v1715
    %v1786 = vpop.f32.mrb[0].mxu0
    %v1787 = vadd.f32 0.0, %v1786
    %v1788 = vpop.f32.mrb[0].mxu0
    %1789 = vmatprep.mubr.f32.mxu0 0.0
    %1790 = vmatmul.mubr.f32.gmra.mrb[0].mxu0 %v1718
    %v1791 = vpop.f32.mrb[0].mxu0
    %v1792 = vadd.f32 0.0, %v1791
    %v1793 = vpop.f32.mrb[0].mxu0
    %1794 = vdwg.mxu0
    %v1795 = vcombine.low %v1544, %v1706
    %v1796 = vcombine.high %v1544, %v1706
    %v1798 = vunpack.c.l.s4 1983009808
    %v1799 = vunpack.c.0.s8 %v1798
    %v1800 = vlaneseq
    %v1801 = vshrl.u32 %v1800, 7
    %v1802 = vsub.s32 %v1799, %v1801
    %v1803 = vrot.slane %v1795, %v1802
    %v1805 = vunpack.c.l.s4 1983009808
    %v1806 = vunpack.c.0.s8 %v1805
    %v1807 = vlaneseq
    %v1808 = vshrl.u32 %v1807, 7
    %v1809 = vsub.s32 %v1806, %v1808
    %v1810 = vrot.slane %v1796, %v1809
    %v1811 = vcombine.low %v1625, %v1787
    %v1812 = vcombine.high %v1625, %v1787
    %v1814 = vunpack.c.l.s4 1983009808
    %v1815 = vunpack.c.0.s8 %v1814
    %v1816 = vlaneseq
    %v1817 = vshrl.u32 %v1816, 7
    %v1818 = vsub.s32 %v1815, %v1817
    %v1819 = vrot.slane %v1811, %v1818
    %v1821 = vunpack.c.l.s4 1983009808
    %v1822 = vunpack.c.0.s8 %v1821
    %v1823 = vlaneseq
    %v1824 = vshrl.u32 %v1823, 7
    %v1825 = vsub.s32 %v1822, %v1824
    %v1826 = vrot.slane %v1812, %v1825
    %v1827 = vcombine.low %v1803, %v1819
    %v1828 = vcombine.high %v1803, %v1819
    %v1830 = vunpack.c.l.s4 1934713408
    %v1831 = vunpack.c.0.s8 %v1830
    %v1832 = vlaneseq
    %v1833 = vshrl.u32 %v1832, 7
    %v1834 = vsub.s32 %v1831, %v1833
    %v1835 = vrot.slane %v1827, %v1834
    %v1837 = vunpack.c.l.s4 1934713408
    %v1838 = vunpack.c.0.s8 %v1837
    %v1839 = vlaneseq
    %v1840 = vshrl.u32 %v1839, 7
    %v1841 = vsub.s32 %v1838, %v1840
    %v1842 = vrot.slane %v1828, %v1841
    %v1843 = vcombine.low %v1810, %v1826
    %v1844 = vcombine.high %v1810, %v1826
    %v1846 = vunpack.c.l.s4 1934713408
    %v1847 = vunpack.c.0.s8 %v1846
    %v1848 = vlaneseq
    %v1849 = vshrl.u32 %v1848, 7
    %v1850 = vsub.s32 %v1847, %v1849
    %v1851 = vrot.slane %v1843, %v1850
    %v1853 = vunpack.c.l.s4 1934713408
    %v1854 = vunpack.c.0.s8 %v1853
    %v1855 = vlaneseq
    %v1856 = vshrl.u32 %v1855, 7
    %v1857 = vsub.s32 %v1854, %v1856
    %v1858 = vrot.slane %v1844, %v1857
    %v1859 = vcombine.high %v1835, 0.0
    %v1860 = vcombine.high %v1842, 0.0
    %v1861 = vcombine.high %v1851, 0.0
    %v1862 = vcombine.high %v1858, 0.0
    %v1863 = vcombine.low %v1549, %v1711
    %v1864 = vcombine.high %v1549, %v1711
    %v1866 = vunpack.c.l.s4 1983009808
    %v1867 = vunpack.c.0.s8 %v1866
    %v1868 = vlaneseq
    %v1869 = vshrl.u32 %v1868, 7
    %v1870 = vsub.s32 %v1867, %v1869
    %v1871 = vrot.slane %v1863, %v1870
    %v1873 = vunpack.c.l.s4 1983009808
    %v1874 = vunpack.c.0.s8 %v1873
    %v1875 = vlaneseq
    %v1876 = vshrl.u32 %v1875, 7
    %v1877 = vsub.s32 %v1874, %v1876
    %v1878 = vrot.slane %v1864, %v1877
    %v1879 = vcombine.low %v1630, %v1792
    %v1880 = vcombine.high %v1630, %v1792
    %v1882 = vunpack.c.l.s4 1983009808
    %v1883 = vunpack.c.0.s8 %v1882
    %v1884 = vlaneseq
    %v1885 = vshrl.u32 %v1884, 7
    %v1886 = vsub.s32 %v1883, %v1885
    %v1887 = vrot.slane %v1879, %v1886
    %v1889 = vunpack.c.l.s4 1983009808
    %v1890 = vunpack.c.0.s8 %v1889
    %v1891 = vlaneseq
    %v1892 = vshrl.u32 %v1891, 7
    %v1893 = vsub.s32 %v1890, %v1892
    %v1894 = vrot.slane %v1880, %v1893
    %v1895 = vcombine.low %v1871, %v1887
    %v1896 = vcombine.high %v1871, %v1887
    %v1898 = vunpack.c.l.s4 1934713408
    %v1899 = vunpack.c.0.s8 %v1898
    %v1900 = vlaneseq
    %v1901 = vshrl.u32 %v1900, 7
    %v1902 = vsub.s32 %v1899, %v1901
    %v1903 = vrot.slane %v1895, %v1902
    %v1905 = vunpack.c.l.s4 1934713408
    %v1906 = vunpack.c.0.s8 %v1905
    %v1907 = vlaneseq
    %v1908 = vshrl.u32 %v1907, 7
    %v1909 = vsub.s32 %v1906, %v1908
    %v1910 = vrot.slane %v1896, %v1909
    %v1911 = vcombine.low %v1878, %v1894
    %v1912 = vcombine.high %v1878, %v1894
    %v1914 = vunpack.c.l.s4 1934713408
    %v1915 = vunpack.c.0.s8 %v1914
    %v1916 = vlaneseq
    %v1917 = vshrl.u32 %v1916, 7
    %v1918 = vsub.s32 %v1915, %v1917
    %v1919 = vrot.slane %v1911, %v1918
    %v1921 = vunpack.c.l.s4 1934713408
    %v1922 = vunpack.c.0.s8 %v1921
    %v1923 = vlaneseq
    %v1924 = vshrl.u32 %v1923, 7
    %v1925 = vsub.s32 %v1922, %v1924
    %v1926 = vrot.slane %v1912, %v1925
    %v1927 = vcombine.high %v1903, 0.0
    %v1928 = vcombine.high %v1910, 0.0
    %v1929 = vcombine.high %v1919, 0.0
    %v1930 = vcombine.high %v1926, 0.0
    %v1931 = vcombine.low %v1835, %v1842
    %v1933 = vunpack.c.l.s4 1983009808
    %v1934 = vunpack.c.0.s8 %v1933
    %v1935 = vlaneseq
    %v1936 = vshrl.u32 %v1935, 7
    %v1937 = vsub.s32 %v1934, %v1936
    %v1938 = vrot.slane %v1931, %v1937
    %v1939 = vcombine.low %v1859, %v1860
    %v1941 = vunpack.c.l.s4 1983009808
    %v1942 = vunpack.c.0.s8 %v1941
    %v1943 = vlaneseq
    %v1944 = vshrl.u32 %v1943, 7
    %v1945 = vsub.s32 %v1942, %v1944
    %v1946 = vrot.slane %v1939, %v1945
    %v1947 = vcombine.low %v1851, %v1858
    %v1949 = vunpack.c.l.s4 1983009808
    %v1950 = vunpack.c.0.s8 %v1949
    %v1951 = vlaneseq
    %v1952 = vshrl.u32 %v1951, 7
    %v1953 = vsub.s32 %v1950, %v1952
    %v1954 = vrot.slane %v1947, %v1953
    %v1955 = vcombine.low %v1861, %v1862
    %v1957 = vunpack.c.l.s4 1983009808
    %v1958 = vunpack.c.0.s8 %v1957
    %v1959 = vlaneseq
    %v1960 = vshrl.u32 %v1959, 7
    %v1961 = vsub.s32 %v1958, %v1960
    %v1962 = vrot.slane %v1955, %v1961
    %v1963 = vcombine.low %v1938, %v1946
    %v1964 = vcombine.high %v1938, %v1946
    %v1966 = vunpack.c.l.s4 1934713408
    %v1967 = vunpack.c.0.s8 %v1966
    %v1968 = vlaneseq
    %v1969 = vshrl.u32 %v1968, 7
    %v1970 = vsub.s32 %v1967, %v1969
    %v1971 = vrot.slane %v1963, %v1970
    %v1973 = vunpack.c.l.s4 1934713408
    %v1974 = vunpack.c.0.s8 %v1973
    %v1975 = vlaneseq
    %v1976 = vshrl.u32 %v1975, 7
    %v1977 = vsub.s32 %v1974, %v1976
    %v1978 = vrot.slane %v1964, %v1977
    %v1979 = vcombine.low %v1954, %v1962
    %v1980 = vcombine.high %v1954, %v1962
    %v1982 = vunpack.c.l.s4 1934713408
    %v1983 = vunpack.c.0.s8 %v1982
    %v1984 = vlaneseq
    %v1985 = vshrl.u32 %v1984, 7
    %v1986 = vsub.s32 %v1983, %v1985
    %v1987 = vrot.slane %v1979, %v1986
    %v1989 = vunpack.c.l.s4 1934713408
    %v1990 = vunpack.c.0.s8 %v1989
    %v1991 = vlaneseq
    %v1992 = vshrl.u32 %v1991, 7
    %v1993 = vsub.s32 %v1990, %v1992
    %v1994 = vrot.slane %v1980, %v1993
    %v1995 = vcombine.low %v1971, %v1987
    %v1996 = vcombine.high %v1971, %v1987
    %v1997 = vcombine.low %v1978, %v1994
    %v1998 = vcombine.high %v1978, %v1994
    %v1999 = vcombine.low %v1903, %v1910
    %v2001 = vunpack.c.l.s4 1983009808
    %v2002 = vunpack.c.0.s8 %v2001
    %v2003 = vlaneseq
    %v2004 = vshrl.u32 %v2003, 7
    %v2005 = vsub.s32 %v2002, %v2004
    %v2006 = vrot.slane %v1999, %v2005
    %v2007 = vcombine.low %v1927, %v1928
    %v2009 = vunpack.c.l.s4 1983009808
    %v2010 = vunpack.c.0.s8 %v2009
    %v2011 = vlaneseq
    %v2012 = vshrl.u32 %v2011, 7
    %v2013 = vsub.s32 %v2010, %v2012
    %v2014 = vrot.slane %v2007, %v2013
    %v2015 = vcombine.low %v1919, %v1926
    %v2017 = vunpack.c.l.s4 1983009808
    %v2018 = vunpack.c.0.s8 %v2017
    %v2019 = vlaneseq
    %v2020 = vshrl.u32 %v2019, 7
    %v2021 = vsub.s32 %v2018, %v2020
    %v2022 = vrot.slane %v2015, %v2021
    %v2023 = vcombine.low %v1929, %v1930
    %v2025 = vunpack.c.l.s4 1983009808
    %v2026 = vunpack.c.0.s8 %v2025
    %v2027 = vlaneseq
    %v2028 = vshrl.u32 %v2027, 7
    %v2029 = vsub.s32 %v2026, %v2028
    %v2030 = vrot.slane %v2023, %v2029
    %v2031 = vcombine.low %v2006, %v2014
    %v2032 = vcombine.high %v2006, %v2014
    %v2034 = vunpack.c.l.s4 1934713408
    %v2035 = vunpack.c.0.s8 %v2034
    %v2036 = vlaneseq
    %v2037 = vshrl.u32 %v2036, 7
    %v2038 = vsub.s32 %v2035, %v2037
    %v2039 = vrot.slane %v2031, %v2038
    %v2041 = vunpack.c.l.s4 1934713408
    %v2042 = vunpack.c.0.s8 %v2041
    %v2043 = vlaneseq
    %v2044 = vshrl.u32 %v2043, 7
    %v2045 = vsub.s32 %v2042, %v2044
    %v2046 = vrot.slane %v2032, %v2045
    %v2047 = vcombine.low %v2022, %v2030
    %v2048 = vcombine.high %v2022, %v2030
    %v2050 = vunpack.c.l.s4 1934713408
    %v2051 = vunpack.c.0.s8 %v2050
    %v2052 = vlaneseq
    %v2053 = vshrl.u32 %v2052, 7
    %v2054 = vsub.s32 %v2051, %v2053
    %v2055 = vrot.slane %v2047, %v2054
    %v2057 = vunpack.c.l.s4 1934713408
    %v2058 = vunpack.c.0.s8 %v2057
    %v2059 = vlaneseq
    %v2060 = vshrl.u32 %v2059, 7
    %v2061 = vsub.s32 %v2058, %v2060
    %v2062 = vrot.slane %v2048, %v2061
    %v2063 = vcombine.low %v2039, %v2055
    %v2064 = vcombine.high %v2039, %v2055
    %v2065 = vcombine.low %v2046, %v2062
    %v2066 = vcombine.high %v2046, %v2062
    %2069 = vrot.lane.b32.xlu0 %v1996, 8
    %v2070 = vpop.permute.xlu0 %2069
    %2071 = vrot.lane.b32.xlu0 %v2064, 8
    %v2072 = vpop.permute.xlu0 %2071
    %2077 = vrot.lane.b32.xlu0 %v1997, 16
    %v2078 = vpop.permute.xlu0 %2077
    %2079 = vrot.lane.b32.xlu0 %v2065, 16
    %v2080 = vpop.permute.xlu0 %2079
    %2085 = vrot.lane.b32.xlu0 %v1998, 24
    %v2086 = vpop.permute.xlu0 %2085
    %2087 = vrot.lane.b32.xlu0 %v2066, 24
    %v2088 = vpop.permute.xlu0 %2087
    %v2091 = vsel %vm1009, %v1995, %v2070
    %v2092 = vsel %vm1009, %v2063, %v2072
    %v2093 = vsel %vm1358, %v2091, %v2078
    %v2094 = vsel %vm1358, %v2092, %v2080
    %vm2095 = vcmask 195584
    %v2096 = vsel %vm2095, %v2093, %v2086
    %v2097 = vsel %vm2095, %v2094, %v2088
    %v2098 = vld [vmem:[%s3] sm:$0xff]
    %v2099 = vld [vmem:[%s3 + $0x8] sm:$0xff]
    %v2100 = vld [vmem:[%s3 + $0x10] sm:$0xff]
    %v2101 = vld [vmem:[%s3 + $0x18] sm:$0xff]
    %v2102 = vld [vmem:[%s7] sm:$0x1]
    %v2103 = vlaneseq
    %v2104 = vshrl.u32 %v2103, 7
    %v2105 = vsub.s32 0, %v2104
    %v2106 = vrot.slane %v2102, %v2105
    %v2108 = vsel %vm41, %v2096, 0
    %v2111 = vsel %vm41, %v2097, 0
    %2113 = vmatprep.subr.mxu0 0.0
    %2114 = vmatpush1.msra.mxu0 %v2098
    %2115 = vmatprep.subr.mxu0 0.0
    %2116 = vmatpush1.msra.mxu0 %v2099
    %2117 = vmatprep.subr.mxu0 0.0
    %2118 = vmatpush1.msra.mxu0 %v2100
    %2119 = vmatprep.subr.mxu0 0.0
    %2120 = vmatpush1.msra.mxu0 %v2101
    %2121 = vmatprep.subr.mxu0 0.0
    %2122 = vmatpush1.msra.mxu0 0.0
    %2123 = vmatprep.subr.mxu0 0.0
    %2124 = vmatpush1.msra.mxu0 0.0
    %2125 = vmatprep.subr.mxu0 0.0
    %2126 = vmatpush1.msra.mxu0 0.0
    %2127 = vmatprep.subr.mxu0 0.0
    %2128 = vmatpush1.msra.mxu0 0.0
    %2129 = vmatprep.subr.mxu0 0.0
    %2130 = vmatpush1.msra.mxu0 0.0
    %2131 = vmatprep.subr.mxu0 0.0
    %2132 = vmatpush1.msra.mxu0 0.0
    %2133 = vmatprep.subr.mxu0 0.0
    %2134 = vmatpush1.msra.mxu0 0.0
    %2135 = vmatprep.subr.mxu0 0.0
    %2136 = vmatpush1.msra.mxu0 0.0
    %2137 = vmatprep.subr.mxu0 0.0
    %2138 = vmatpush1.msra.mxu0 0.0
    %2139 = vmatprep.subr.mxu0 0.0
    %2140 = vmatpush1.msra.mxu0 0.0
    %2141 = vmatprep.subr.mxu0 0.0
    %2142 = vmatpush1.msra.mxu0 0.0
    %2143 = vmatprep.subr.mxu0 0.0
    %2144 = vmatpush1.msra.mxu0 0.0
    %2145 = vmatprep.subr.mxu0 0.0
    %2146 = vmatpush1.msra.mxu0 0.0
    %2147 = vmatprep.subr.mxu0 0.0
    %2148 = vmatpush1.msra.mxu0 0.0
    %2149 = vmatprep.subr.mxu0 0.0
    %2150 = vmatpush1.msra.mxu0 0.0
    %2151 = vmatprep.subr.mxu0 0.0
    %2152 = vmatpush1.msra.mxu0 0.0
    %2153 = vmatprep.subr.mxu0 0.0
    %2154 = vmatpush1.msra.mxu0 0.0
    %2155 = vmatprep.subr.mxu0 0.0
    %2156 = vmatpush1.msra.mxu0 0.0
    %2157 = vmatprep.subr.mxu0 0.0
    %2158 = vmatpush1.msra.mxu0 0.0
    %2159 = vmatprep.subr.mxu0 0.0
    %2160 = vmatpush1.msra.mxu0 0.0
    %2161 = vmatprep.subr.mxu0 0.0
    %2162 = vmatpush1.msra.mxu0 0.0
    %2163 = vmatprep.subr.mxu0 0.0
    %2164 = vmatpush1.msra.mxu0 0.0
    %2165 = vmatprep.subr.mxu0 0.0
    %2166 = vmatpush1.msra.mxu0 0.0
    %2167 = vmatprep.subr.mxu0 0.0
    %2168 = vmatpush1.msra.mxu0 0.0
    %2169 = vmatprep.subr.mxu0 0.0
    %2170 = vmatpush1.msra.mxu0 0.0
    %2171 = vmatprep.subr.mxu0 0.0
    %2172 = vmatpush1.msra.mxu0 0.0
    %2173 = vmatprep.subr.mxu0 0.0
    %2174 = vmatpush1.msra.mxu0 0.0
    %2175 = vmatprep.subr.mxu0 0.0
    %2176 = vmatpush1.msra.mxu0 0.0
    %2177 = vmatprep.mubr.f32.mxu0 0.0
    %2178 = vmatmul.mubr.f32.gmra.mrb[0].mxu0 %v2108
    %v2179 = vpop.f32.mrb[0].mxu0
    %v2180 = vadd.f32 %v2106, %v2179
    %v2181 = vpop.f32.mrb[0].mxu0
    %2182 = vmatprep.mubr.f32.mxu0 0.0
    %2183 = vmatmul.mubr.f32.gmra.mrb[0].mxu0 %v2111
    %v2184 = vpop.f32.mrb[0].mxu0
    %v2185 = vadd.f32 %v2106, %v2184
    %v2186 = vpop.f32.mrb[0].mxu0
    %2187 = vdwg.mxu0
    %v2188 = vadd.f32 %v30, %v2180
    %v2189 = vadd.f32 %v31, %v2185
    %v2190 = vsel %vm41, %v2188, 0.0
    %2191 = vadd.xlane.f32.xlu0 %v2190
    %v2192 = vpop.xlane.xlu0 %2191
    %v2193 = vsel %vm41, %v2189, 0.0
    %2194 = vadd.xlane.f32.xlu0 %v2193
    %v2195 = vpop.xlane.xlu0 %2194
    %v2196 = vrcp.pop 32.0
    %v2197 = vmul.f32 %v2192, %v2196
    %v2198 = vmul.f32 %v2195, %v2196
    %v2199 = vsub.f32 %v2188, %v2197
    %v2200 = vsub.f32 %v2189, %v2198
    %v2201 = vmul.f32 %v2199, %v2199
    %v2202 = vmul.f32 %v2200, %v2200
    %v2203 = vsel %vm41, %v2201, 0.0
    %2204 = vadd.xlane.f32.xlu0 %v2203
    %v2205 = vpop.xlane.xlu0 %2204
    %v2206 = vsel %vm41, %v2202, 0.0
    %2207 = vadd.xlane.f32.xlu0 %v2206
    %v2208 = vpop.xlane.xlu0 %2207
    %v2209 = vmul.f32 %v2205, %v2196
    %v2210 = vmul.f32 %v2208, %v2196
    %v2211 = vadd.f32 %v2209, 1e-05
    %v2212 = vadd.f32 %v2210, 1e-05
    %v2213 = vrsqrt.pop %v2211
    %v2214 = vrsqrt.pop %v2212
    %v2215 = vmul.f32 %v2199, %v2213
    %v2216 = vmul.f32 %v2200, %v2214
    %v2217 = vld [vmem:[%s7 + $0x1] sm:$0x1]
    %v2218 = vlaneseq
    %v2219 = vshrl.u32 %v2218, 7
    %v2220 = vsub.s32 0, %v2219
    %v2221 = vrot.slane %v2217, %v2220
    %v2222 = vmul.f32 %v2215, %v2221
    %v2223 = vmul.f32 %v2216, %v2221
    %v2224 = vld [vmem:[%s7 + $0x2] sm:$0x1]
    %v2225 = vlaneseq
    %v2226 = vshrl.u32 %v2225, 7
    %v2227 = vsub.s32 0, %v2226
    %v2228 = vrot.slane %v2224, %v2227
    %v2229 = vadd.f32 %v2222, %v2228
    %v2230 = vadd.f32 %v2223, %v2228
    %v2231 = vld [vmem:[%s4] sm:$0xff]
    %v2232 = vld [vmem:[%s4 + $0x8] sm:$0xff]
    %v2233 = vld [vmem:[%s4 + $0x10] sm:$0xff]
    %v2234 = vld [vmem:[%s4 + $0x18] sm:$0xff]
    %v2235 = vld [vmem:[%s6 + $0x1] sm:$0x1]
    %v2236 = vlaneseq
    %v2237 = vshrl.u32 %v2236, 7
    %v2238 = vsub.s32 0, %v2237
    %v2239 = vrot.slane %v2235, %v2238
    %v2241 = vsel %vm41, %v2229, 0
    %v2244 = vsel %vm41, %v2230, 0
    %2246 = vmatprep.subr.mxu0 0.0
    %2247 = vmatpush1.msra.mxu0 %v2231
    %2248 = vmatprep.subr.mxu0 0.0
    %2249 = vmatpush1.msra.mxu0 %v2232
    %2250 = vmatprep.subr.mxu0 0.0
    %2251 = vmatpush1.msra.mxu0 %v2233
    %2252 = vmatprep.subr.mxu0 0.0
    %2253 = vmatpush1.msra.mxu0 %v2234
    %2254 = vmatprep.subr.mxu0 0.0
    %2255 = vmatpush1.msra.mxu0 0.0
    %2256 = vmatprep.subr.mxu0 0.0
    %2257 = vmatpush1.msra.mxu0 0.0
    %2258 = vmatprep.subr.mxu0 0.0
    %2259 = vmatpush1.msra.mxu0 0.0
    %2260 = vmatprep.subr.mxu0 0.0
    %2261 = vmatpush1.msra.mxu0 0.0
    %2262 = vmatprep.subr.mxu0 0.0
    %2263 = vmatpush1.msra.mxu0 0.0
    %2264 = vmatprep.subr.mxu0 0.0
    %2265 = vmatpush1.msra.mxu0 0.0
    %2266 = vmatprep.subr.mxu0 0.0
    %2267 = vmatpush1.msra.mxu0 0.0
    %2268 = vmatprep.subr.mxu0 0.0
    %2269 = vmatpush1.msra.mxu0 0.0
    %2270 = vmatprep.subr.mxu0 0.0
    %2271 = vmatpush1.msra.mxu0 0.0
    %2272 = vmatprep.subr.mxu0 0.0
    %2273 = vmatpush1.msra.mxu0 0.0
    %2274 = vmatprep.subr.mxu0 0.0
    %2275 = vmatpush1.msra.mxu0 0.0
    %2276 = vmatprep.subr.mxu0 0.0
    %2277 = vmatpush1.msra.mxu0 0.0
    %2278 = vmatprep.subr.mxu0 0.0
    %2279 = vmatpush1.msra.mxu0 0.0
    %2280 = vmatprep.subr.mxu0 0.0
    %2281 = vmatpush1.msra.mxu0 0.0
    %2282 = vmatprep.subr.mxu0 0.0
    %2283 = vmatpush1.msra.mxu0 0.0
    %2284 = vmatprep.subr.mxu0 0.0
    %2285 = vmatpush1.msra.mxu0 0.0
    %2286 = vmatprep.subr.mxu0 0.0
    %2287 = vmatpush1.msra.mxu0 0.0
    %2288 = vmatprep.subr.mxu0 0.0
    %2289 = vmatpush1.msra.mxu0 0.0
    %2290 = vmatprep.subr.mxu0 0.0
    %2291 = vmatpush1.msra.mxu0 0.0
    %2292 = vmatprep.subr.mxu0 0.0
    %2293 = vmatpush1.msra.mxu0 0.0
    %2294 = vmatprep.subr.mxu0 0.0
    %2295 = vmatpush1.msra.mxu0 0.0
    %2296 = vmatprep.subr.mxu0 0.0
    %2297 = vmatpush1.msra.mxu0 0.0
    %2298 = vmatprep.subr.mxu0 0.0
    %2299 = vmatpush1.msra.mxu0 0.0
    %2300 = vmatprep.subr.mxu0 0.0
    %2301 = vmatpush1.msra.mxu0 0.0
    %2302 = vmatprep.subr.mxu0 0.0
    %2303 = vmatpush1.msra.mxu0 0.0
    %2304 = vmatprep.subr.mxu0 0.0
    %2305 = vmatpush1.msra.mxu0 0.0
    %2306 = vmatprep.subr.mxu0 0.0
    %2307 = vmatpush1.msra.mxu0 0.0
    %2308 = vmatprep.subr.mxu0 0.0
    %2309 = vmatpush1.msra.mxu0 0.0
    %2310 = vmatprep.mubr.f32.mxu0 0.0
    %2311 = vmatmul.mubr.f32.gmra.mrb[0].mxu0 %v2241
    %v2312 = vpop.f32.mrb[0].mxu0
    %v2313 = vadd.f32 %v2239, %v2312
    %v2314 = vpop.f32.mrb[0].mxu0
    %2315 = vmatprep.mubr.f32.mxu0 0.0
    %2316 = vmatmul.mubr.f32.gmra.mrb[0].mxu0 %v2244
    %v2317 = vpop.f32.mrb[0].mxu0
    %v2318 = vadd.f32 %v2239, %v2317
    %v2319 = vpop.f32.mrb[0].mxu0
    %2320 = vdwg.mxu0
    %v2321 = vmax.f32 %v2313, 0.0
    %v2322 = vmax.f32 %v2318, 0.0
    %v2323 = vld [vmem:[%s5] sm:$0xff]
    %v2324 = vld [vmem:[%s5 + $0x8] sm:$0xff]
    %v2325 = vld [vmem:[%s5 + $0x10] sm:$0xff]
    %v2326 = vld [vmem:[%s5 + $0x18] sm:$0xff]
    %v2327 = vld [vmem:[%s5 + $0x20] sm:$0xff]
    %v2328 = vld [vmem:[%s5 + $0x28] sm:$0xff]
    %v2329 = vld [vmem:[%s5 + $0x30] sm:$0xff]
    %v2330 = vld [vmem:[%s5 + $0x38] sm:$0xff]
    %v2331 = vld [vmem:[%s7 + $0x3] sm:$0x1]
    %v2332 = vlaneseq
    %v2333 = vshrl.u32 %v2332, 7
    %v2334 = vsub.s32 0, %v2333
    %v2335 = vrot.slane %v2331, %v2334
    %vm2336 = vcmask 523264
    %v2338 = vsel %vm2336, %v2321, 0
    %v2341 = vsel %vm2336, %v2322, 0
    %2343 = vmatprep.subr.mxu0 0.0
    %2344 = vmatpush1.msra.mxu0 %v2323
    %2345 = vmatprep.subr.mxu0 0.0
    %2346 = vmatpush1.msra.mxu0 %v2324
    %2347 = vmatprep.subr.mxu0 0.0
    %2348 = vmatpush1.msra.mxu0 %v2325
    %2349 = vmatprep.subr.mxu0 0.0
    %2350 = vmatpush1.msra.mxu0 %v2326
    %2351 = vmatprep.subr.mxu0 0.0
    %2352 = vmatpush1.msra.mxu0 %v2327
    %2353 = vmatprep.subr.mxu0 0.0
    %2354 = vmatpush1.msra.mxu0 %v2328
    %2355 = vmatprep.subr.mxu0 0.0
    %2356 = vmatpush1.msra.mxu0 %v2329
    %2357 = vmatprep.subr.mxu0 0.0
    %2358 = vmatpush1.msra.mxu0 %v2330
    %2359 = vmatprep.subr.mxu0 0.0
    %2360 = vmatpush1.msra.mxu0 0.0
    %2361 = vmatprep.subr.mxu0 0.0
    %2362 = vmatpush1.msra.mxu0 0.0
    %2363 = vmatprep.subr.mxu0 0.0
    %2364 = vmatpush1.msra.mxu0 0.0
    %2365 = vmatprep.subr.mxu0 0.0
    %2366 = vmatpush1.msra.mxu0 0.0
    %2367 = vmatprep.subr.mxu0 0.0
    %2368 = vmatpush1.msra.mxu0 0.0
    %2369 = vmatprep.subr.mxu0 0.0
    %2370 = vmatpush1.msra.mxu0 0.0
    %2371 = vmatprep.subr.mxu0 0.0
    %2372 = vmatpush1.msra.mxu0 0.0
    %2373 = vmatprep.subr.mxu0 0.0
    %2374 = vmatpush1.msra.mxu0 0.0
    %2375 = vmatprep.subr.mxu0 0.0
    %2376 = vmatpush1.msra.mxu0 0.0
    %2377 = vmatprep.subr.mxu0 0.0
    %2378 = vmatpush1.msra.mxu0 0.0
    %2379 = vmatprep.subr.mxu0 0.0
    %2380 = vmatpush1.msra.mxu0 0.0
    %2381 = vmatprep.subr.mxu0 0.0
    %2382 = vmatpush1.msra.mxu0 0.0
    %2383 = vmatprep.subr.mxu0 0.0
    %2384 = vmatpush1.msra.mxu0 0.0
    %2385 = vmatprep.subr.mxu0 0.0
    %2386 = vmatpush1.msra.mxu0 0.0
    %2387 = vmatprep.subr.mxu0 0.0
    %2388 = vmatpush1.msra.mxu0 0.0
    %2389 = vmatprep.subr.mxu0 0.0
    %2390 = vmatpush1.msra.mxu0 0.0
    %2391 = vmatprep.subr.mxu0 0.0
    %2392 = vmatpush1.msra.mxu0 0.0
    %2393 = vmatprep.subr.mxu0 0.0
    %2394 = vmatpush1.msra.mxu0 0.0
    %2395 = vmatprep.subr.mxu0 0.0
    %2396 = vmatpush1.msra.mxu0 0.0
    %2397 = vmatprep.subr.mxu0 0.0
    %2398 = vmatpush1.msra.mxu0 0.0
    %2399 = vmatprep.subr.mxu0 0.0
    %2400 = vmatpush1.msra.mxu0 0.0
    %2401 = vmatprep.subr.mxu0 0.0
    %2402 = vmatpush1.msra.mxu0 0.0
    %2403 = vmatprep.subr.mxu0 0.0
    %2404 = vmatpush1.msra.mxu0 0.0
    %2405 = vmatprep.subr.mxu0 0.0
    %2406 = vmatpush1.msra.mxu0 0.0
    %2407 = vmatprep.mubr.f32.mxu0 0.0
    %2408 = vmatmul.mubr.f32.gmra.mrb[0].mxu0 %v2338
    %v2409 = vpop.f32.mrb[0].mxu0
    %v2410 = vadd.f32 %v2335, %v2409
    %v2411 = vpop.f32.mrb[0].mxu0
    %2412 = vmatprep.mubr.f32.mxu0 0.0
    %2413 = vmatmul.mubr.f32.gmra.mrb[0].mxu0 %v2341
    %v2414 = vpop.f32.mrb[0].mxu0
    %v2415 = vadd.f32 %v2335, %v2414
    %v2416 = vpop.f32.mrb[0].mxu0
    %2417 = vdwg.mxu0
    %v2418 = vadd.f32 %v2229, %v2410
    %v2419 = vadd.f32 %v2230, %v2415
    %v2420 = vsel %vm41, %v2418, 0.0
    %2421 = vadd.xlane.f32.xlu0 %v2420
    %v2422 = vpop.xlane.xlu0 %2421
    %v2423 = vsel %vm41, %v2419, 0.0
    %2424 = vadd.xlane.f32.xlu0 %v2423
    %v2425 = vpop.xlane.xlu0 %2424
    %v2426 = vmul.f32 %v2422, %v2196
    %v2427 = vmul.f32 %v2425, %v2196
    %v2428 = vsub.f32 %v2418, %v2426
    %v2429 = vsub.f32 %v2419, %v2427
    %v2430 = vmul.f32 %v2428, %v2428
    %v2431 = vmul.f32 %v2429, %v2429
    %v2432 = vsel %vm41, %v2430, 0.0
    %2433 = vadd.xlane.f32.xlu0 %v2432
    %v2434 = vpop.xlane.xlu0 %2433
    %v2435 = vsel %vm41, %v2431, 0.0
    %2436 = vadd.xlane.f32.xlu0 %v2435
    %v2437 = vpop.xlane.xlu0 %2436
    %v2438 = vmul.f32 %v2434, %v2196
    %v2439 = vmul.f32 %v2437, %v2196
    %v2440 = vadd.f32 %v2438, 1e-05
    %v2441 = vadd.f32 %v2439, 1e-05
    %v2442 = vrsqrt.pop %v2440
    %v2443 = vrsqrt.pop %v2441
    %v2444 = vmul.f32 %v2428, %v2442
    %v2445 = vmul.f32 %v2429, %v2443
    %v2446 = vld [vmem:[%s7 + $0x4] sm:$0x1]
    %v2447 = vlaneseq
    %v2448 = vshrl.u32 %v2447, 7
    %v2449 = vsub.s32 0, %v2448
    %v2450 = vrot.slane %v2446, %v2449
    %v2451 = vmul.f32 %v2444, %v2450
    %v2452 = vmul.f32 %v2445, %v2450
    %v2453 = vld [vmem:[%s7 + $0x5] sm:$0x1]
    %v2454 = vlaneseq
    %v2455 = vshrl.u32 %v2454, 7
    %v2456 = vsub.s32 0, %v2455
    %v2457 = vrot.slane %v2453, %v2456
    %v2458 = vadd.f32 %v2451, %v2457
    %v2459 = vadd.f32 %v2452, %v2457
    %2460 = vst.msk [vmem:[#allocation2] sm:$0xff] %vm41, %v2458
    %2461 = vst.msk [vmem:[#allocation2 + $0x8] sm:$0xff] %vm41, %v2459
    // Predicated region
    $region34: #{encoder_layer.1} parent=1 // pred_check
      _
    $region35: #{encoder_layer.1} parent=1 // pred_check_branch
      %2463 = sbr.rel (0) target = $region37
    $region36: #{encoder_layer.1} parent=1 // pred_region
      %s2465 = ssub.s32 256, 256
      %2466 = vsyncadd [#allocation3], %s2465
      %s2467 = sshll.u32 [#allocation2], 4
      %s2468 = int_to_ptr.vmem [resolvable:$true] %s2467
      %2473 = dma.vmem_to_hbm [thread:$0]  %s2468, 256, %s8, [#allocation3], 128, 128, 8
    $region37: #{encoder_layer.1} parent=1 // pred_fallthru
      _
    // Predicated region
    $region38: #{encoder_layer.1} parent=1 // pred_check
      _
    $region39: #{encoder_layer.1} parent=1 // pred_check_branch
      %2475 = sbr.rel (0) target = $region41
    $region40: #{encoder_layer.1} parent=1 // pred_region
      %2476 = dma.done [#allocation3], 256
    $region41: #{encoder_layer.1} parent=1 // pred_fallthru
      _
    %2477 = vsyncpa [#allocation3], 1

</llo_original>
